<compile_context>
chip_gen: v5e
topology: v5e:2x2
jax: 0.10.0
libtpu: 0.0.40
codegen_flags: <defaults>
</compile_context>

<pallas_src>
import jax
import jax.numpy as jnp
from jax import lax
from jax.experimental import pallas as pl
from jax.experimental.pallas import tpu as pltpu

D_FEAT = 6
HIDDEN = 32       # small-shape stand-in for the module default 64 (4H = 128 lanes)
NUM_LAYERS = 2    # matches the module default
B_BLK = 8         # batch block = sublane width


def lstm_kernel(x_ref, wih0_ref, b0_ref, wcomb_ref, b1_ref, wfc_ref, bfc_ref,
                out_ref):
    # x_ref:     (T, B, D)   bf16, time-major
    # wih0_ref:  (D, 4H)     bf16   b0_ref: (1, 4H) f32  (fused b_ih+b_hh, layer 0)
    # wcomb_ref: (2H, 8H)    bf16   = [[whh0, wih1], [0, whh1]]
    # b1_ref:    (1, 4H)     f32    (fused bias, layer 1)
    # wfc_ref:   (H, 1) f32  bfc_ref: (1, 1) f32
    # out_ref:   (B, 1) f32
    T, B, D = x_ref.shape
    H = wcomb_ref.shape[0] // 2
    G = 4 * H

    # Loop-invariant loads, hoisted once.
    wcomb = wcomb_ref[...]
    b1 = b1_ref[...]

    # Hoisted layer-0 input projection (+ fused bias): one batched bf16 MXU
    # matmul over all timesteps, f32 accumulation.
    xproj = (jnp.dot(x_ref[...].reshape(T * B, D), wih0_ref[...],
                     preferred_element_type=jnp.float32)
             + b0_ref[...]).reshape(T, B, G)

    def gate_math(gates, c):
        # Packed gate order (permuted at init): i | f | o | g.
        # One sigmoid over 3H lanes + one tanh over H lanes (+ tanh(c_new)).
        sig = jax.nn.sigmoid(gates[:, 0:3 * H])
        g = jnp.tanh(gates[:, 3 * H:4 * H])
        i = sig[:, 0:H]
        f = sig[:, H:2 * H]
        o = sig[:, 2 * H:3 * H]
        c_new = f * c + i * g
        h_new = o * jnp.tanh(c_new)
        return h_new, c_new

    zeros = jnp.zeros((B, H), jnp.float32)
    h0, c0 = zeros, zeros   # layer-0 state (f32)
    h1, c1 = zeros, zeros   # layer-1 state (f32)

    def wave_dot(h0_cur, h1_cur):
        # One MXU push producing both layers' recurrent pre-gates.
        hcat = jnp.concatenate([h0_cur, h1_cur], axis=1).astype(jnp.bfloat16)
        return jnp.dot(hcat, wcomb, preferred_element_type=jnp.float32)  # (B, 8H)

    # Wave 0: layer 0 only (h0_{-1} = 0, so its recurrent term vanishes).
    h0, c0 = gate_math(xproj[0], c0)

    # Waves 1 .. T-1: layer 0 at time s and layer 1 at time s-1, from one dot.
    for s in range(1, T):
        gall = wave_dot(h0, h1)
        h0_new, c0 = gate_math(xproj[s] + gall[:, 0:G], c0)   # layer 0, time s
        h1, c1 = gate_math(b1 + gall[:, G:2 * G], c1)         # layer 1, time s-1
        h0 = h0_new

    # Wave T: layer 1 consumes the final layer-0 hidden state.
    gall = wave_dot(h0, h1)
    h1, c1 = gate_math(b1 + gall[:, G:2 * G], c1)              # layer 1, time T-1

    # fc_out on the last timestep of the top layer.
    out_ref[...] = (jnp.dot(h1, wfc_ref[...], preferred_element_type=jnp.float32)
                    + bfc_ref[...])


def lstm_model_forward(x, params):
    """x: (B, T, d_feat) float32, batch_first like nn.LSTM(batch_first=True)."""
    B, T, D = x.shape
    H = HIDDEN

    # Pad batch to the sublane width and relayout batch-first -> time-major
    # (one fused wrapper-side copy); cast the MXU operand to bf16.
    B_pad = max(B_BLK, ((B + B_BLK - 1) // B_BLK) * B_BLK)
    x_tm = jnp.transpose(x, (1, 0, 2))                         # (T, B, D)
    if B_pad != B:
        x_tm = jnp.pad(x_tm, ((0, 0), (0, B_pad - B), (0, 0)))
    x_tm = x_tm.astype(jnp.bfloat16)

    grid = (B_pad // B_BLK,)   # "parallel" batch-block axis (feeds both TCs on v7x)
    out = pl.pallas_call(
        lstm_kernel,
        out_shape=jax.ShapeDtypeStruct((B_pad, 1), jnp.float32),
        grid_spec=pltpu.PrefetchScalarGridSpec(
            num_scalar_prefetch=0,
            grid=grid,
            in_specs=[
                pl.BlockSpec((T, B_BLK, D), lambda b: (0, b, 0)),     # x
                pl.BlockSpec((D, 4 * H), lambda b: (0, 0)),           # wih0
                pl.BlockSpec((1, 4 * H), lambda b: (0, 0)),           # b0
                pl.BlockSpec((2 * H, 8 * H), lambda b: (0, 0)),       # wcomb
                pl.BlockSpec((1, 4 * H), lambda b: (0, 0)),           # b1
                pl.BlockSpec((H, 1), lambda b: (0, 0)),               # wfc
                pl.BlockSpec((1, 1), lambda b: (0, 0)),               # bfc
            ],
            out_specs=pl.BlockSpec((B_BLK, 1), lambda b: (b, 0)),
        ),
        compiler_params=pltpu.CompilerParams(
            dimension_semantics=("parallel",),
            # Tiny footprint here; at production T*B*H re-derive from the
            # actual working set and leave headroom for v7x's 64 MiB VMEM.
            vmem_limit_bytes=32 * 1024 * 1024),
    )(x_tm,
      params["wih0"], params["b0"], params["wcomb"], params["b1"],
      params["wfc"], params["bfc"])
    return out[:B]


def init_raw_params(key, d_feat=D_FEAT, hidden=HIDDEN):
    """Deterministic PyTorch-style init: U(-1/sqrt(H), 1/sqrt(H)), raw shapes."""
    k = 1.0 / jnp.sqrt(hidden)
    keys = jax.random.split(key, 10)

    def u(kk, shape):
        return jax.random.uniform(kk, shape, jnp.float32, -k, k)

    return {
        "w_ih_l0": u(keys[0], (4 * hidden, d_feat)),
        "w_hh_l0": u(keys[1], (4 * hidden, hidden)),
        "b_ih_l0": u(keys[2], (4 * hidden,)),
        "b_hh_l0": u(keys[3], (4 * hidden,)),
        "w_ih_l1": u(keys[4], (4 * hidden, hidden)),
        "w_hh_l1": u(keys[5], (4 * hidden, hidden)),
        "b_ih_l1": u(keys[6], (4 * hidden,)),
        "b_hh_l1": u(keys[7], (4 * hidden,)),
        "w_fc":    u(keys[8], (1, hidden)),
        "b_fc":    u(keys[9], (1,)),
    }


def prep_kernel_params(raw, hidden=HIDDEN):
    """Pre-transpose, permute gate columns [i|f|g|o]->[i|f|o|g], fuse biases,
    and build the stacked block-diagonal wavefront weight."""
    H = hidden

    def perm(w_t):  # (in, 4H) with columns [i|f|g|o] -> [i|f|o|g]
        i, f, g, o = jnp.split(w_t, 4, axis=1)
        return jnp.concatenate([i, f, o, g], axis=1)

    wih0 = perm(raw["w_ih_l0"].T)                              # (D, 4H)
    whh0 = perm(raw["w_hh_l0"].T)                              # (H, 4H)
    b0 = perm((raw["b_ih_l0"] + raw["b_hh_l0"]).reshape(1, 4 * H))
    wih1 = perm(raw["w_ih_l1"].T)                              # (H, 4H)
    whh1 = perm(raw["w_hh_l1"].T)                              # (H, 4H)
    b1 = perm((raw["b_ih_l1"] + raw["b_hh_l1"]).reshape(1, 4 * H))

    # Stacked wavefront weight (2H, 8H):
    #   rows 0:H  multiply h0_t      -> [whh0 | wih1]
    #   rows H:2H multiply h1_{t-1}  -> [  0  | whh1]
    wcomb = jnp.concatenate([
        jnp.concatenate([whh0, wih1], axis=1),
        jnp.concatenate([jnp.zeros((H, 4 * H), jnp.float32), whh1], axis=1),
    ], axis=0)

    return {
        "wih0": wih0.astype(jnp.bfloat16),       # (D, 4H)  bf16 MXU operand
        "b0": b0,                                # (1, 4H)  f32
        "wcomb": wcomb.astype(jnp.bfloat16),     # (2H, 8H) bf16 MXU operand
        "b1": b1,                                # (1, 4H)  f32
        "wfc": raw["w_fc"].T,                    # (H, 1)   f32
        "bfc": raw["b_fc"].reshape(1, 1),        # (1, 1)   f32
    }


def reference_forward(x, raw, hidden=HIDDEN):
    """Pure-JAX f32 reference reproducing nn.LSTM(+Linear) semantics from the
    raw PyTorch-shaped weights (independent of the kernel's weight layout)."""
    B, T, D = x.shape
    H = hidden

    def run_layer(seq, w_ih, w_hh, b_ih, b_hh):
        wih, whh = w_ih.T, w_hh.T
        b = (b_ih + b_hh)[None, :]

        def step(carry, xt):
            h, c = carry
            gates = xt @ wih + h @ whh + b
            i = jax.nn.sigmoid(gates[:, 0:H])
            f = jax.nn.sigmoid(gates[:, H:2 * H])
            g = jnp.tanh(gates[:, 2 * H:3 * H])
            o = jax.nn.sigmoid(gates[:, 3 * H:4 * H])
            c = f * c + i * g
            h = o * jnp.tanh(c)
            return (h, c), h

        zeros = jnp.zeros((B, H), jnp.float32)
        _, hs = lax.scan(step, (zeros, zeros), jnp.transpose(seq, (1, 0, 2)))
        return jnp.transpose(hs, (1, 0, 2))  # (B, T, H)

    h0 = run_layer(x, raw["w_ih_l0"], raw["w_hh_l0"], raw["b_ih_l0"], raw["b_hh_l0"])
    h1 = run_layer(h0, raw["w_ih_l1"], raw["w_hh_l1"], raw["b_ih_l1"], raw["b_hh_l1"])
    return h1[:, -1, :] @ raw["w_fc"].T + raw["b_fc"]


if __name__ == "__main__":
    key = jax.random.PRNGKey(0)
    k_x, k_p = jax.random.split(key)

    B, T = 2, 8
    x = jax.random.normal(k_x, (B, T, D_FEAT), jnp.float32)
    raw = init_raw_params(k_p)
    params = prep_kernel_params(raw)

    out = lstm_model_forward(x, params)
    out = jax.block_until_ready(out)

    ref = reference_forward(x, raw)
    assert out.shape == (B, 1)
    # bf16 MXU operands (f32 accumulation / gate math) -> relaxed tolerance.
    assert jnp.allclose(out, ref, rtol=5e-2, atol=5e-2), (out, ref)

    print("KERNEL_OK")
</pallas_src>

<mosaic_0001>
module attributes {stable_mosaic.version = 11 : i64} {
  func.func @lstm_kernel(%arg0: i32, %arg1: memref<8x8x6xbf16, #tpu.memory_space<vmem>>, %arg2: memref<6x128xbf16, #tpu.memory_space<vmem>>, %arg3: memref<1x128xf32, #tpu.memory_space<vmem>>, %arg4: memref<64x256xbf16, #tpu.memory_space<vmem>>, %arg5: memref<1x128xf32, #tpu.memory_space<vmem>>, %arg6: memref<32x1xf32, #tpu.memory_space<vmem>>, %arg7: memref<1x1xf32, #tpu.memory_space<vmem>>, %arg8: memref<8x1xf32, #tpu.memory_space<vmem>>) attributes {dimension_semantics = [#tpu.dimension_semantics<parallel>], iteration_bounds = array<i64: 1>, scalar_prefetch = 0 : i64, scratch_operands = 0 : i64, tpu.core_type = #tpu.core_type<tc>, window_params = [{transform_indices = @transform_0, window_bounds = array<i64: 8, 8, 6>}, {pipeline_mode = #tpu.pipeline_mode<synchronous>, transform_indices = @transform_1, window_bounds = array<i64: 6, 128>}, {pipeline_mode = #tpu.pipeline_mode<synchronous>, transform_indices = @transform_2, window_bounds = array<i64: 1, 128>}, {pipeline_mode = #tpu.pipeline_mode<synchronous>, transform_indices = @transform_3, window_bounds = array<i64: 64, 256>}, {pipeline_mode = #tpu.pipeline_mode<synchronous>, transform_indices = @transform_4, window_bounds = array<i64: 1, 128>}, {pipeline_mode = #tpu.pipeline_mode<synchronous>, transform_indices = @transform_5, window_bounds = array<i64: 32, 1>}, {pipeline_mode = #tpu.pipeline_mode<synchronous>, transform_indices = @transform_6, window_bounds = array<i64: 1, 1>}, {transform_indices = @transform_7, window_bounds = array<i64: 8, 1>}]} {
    %c0 = arith.constant 0 : index
    %c0_0 = arith.constant 0 : index
    %0 = vector.load %arg4[%c0, %c0_0] : memref<64x256xbf16, #tpu.memory_space<vmem>>, vector<64x256xbf16>
    %c0_1 = arith.constant 0 : index
    %c0_2 = arith.constant 0 : index
    %1 = vector.load %arg5[%c0_1, %c0_2] : memref<1x128xf32, #tpu.memory_space<vmem>>, vector<1x128xf32>
    %c0_3 = arith.constant 0 : index
    %c0_4 = arith.constant 0 : index
    %c0_5 = arith.constant 0 : index
    %2 = vector.load %arg1[%c0_3, %c0_4, %c0_5] : memref<8x8x6xbf16, #tpu.memory_space<vmem>>, vector<8x8x6xbf16>
    %3 = vector.shape_cast %2 : vector<8x8x6xbf16> to vector<64x6xbf16>
    %c0_6 = arith.constant 0 : index
    %c0_7 = arith.constant 0 : index
    %4 = vector.load %arg2[%c0_6, %c0_7] : memref<6x128xbf16, #tpu.memory_space<vmem>>, vector<6x128xbf16>
    %cst = arith.constant dense<0.000000e+00> : vector<64x128xf32>
    %5 = tpu.matmul %3, %4, %cst {dimension_numbers = #tpu.dot_dimension_numbers<[1], [0], [0], [1], [0, 0, 1, 1], [], []>} : vector<64x6xbf16>, vector<6x128xbf16>, vector<64x128xf32> -> vector<64x128xf32>
    %c0_8 = arith.constant 0 : index
    %c0_9 = arith.constant 0 : index
    %6 = vector.load %arg3[%c0_8, %c0_9] : memref<1x128xf32, #tpu.memory_space<vmem>>, vector<1x128xf32>
    %7 = vector.broadcast %6 : vector<1x128xf32> to vector<64x128xf32>
    %8 = arith.addf %5, %7 : vector<64x128xf32>
    %9 = vector.shape_cast %8 : vector<64x128xf32> to vector<8x8x128xf32>
    %cst_10 = arith.constant 0.000000e+00 : f32
    %10 = vector.broadcast %cst_10 : f32 to vector<8x32xf32>
    %11 = vector.extract_strided_slice %9 {offsets = [0, 0, 0], sizes = [1, 8, 128], strides = [1, 1, 1]} : vector<8x8x128xf32> to vector<1x8x128xf32>
    %12 = vector.shape_cast %11 : vector<1x8x128xf32> to vector<8x128xf32>
    %13 = vector.extract_strided_slice %12 {offsets = [0, 0], sizes = [8, 96], strides = [1, 1]} : vector<8x128xf32> to vector<8x96xf32>
    %14 = arith.negf %13 : vector<8x96xf32>
    %15 = math.exp %14 : vector<8x96xf32>
    %cst_11 = arith.constant 1.000000e+00 : f32
    %16 = vector.broadcast %cst_11 : f32 to vector<8x96xf32>
    %17 = arith.addf %16, %15 : vector<8x96xf32>
    %18 = arith.divf %16, %17 : vector<8x96xf32>
    %19 = vector.extract_strided_slice %12 {offsets = [0, 96], sizes = [8, 32], strides = [1, 1]} : vector<8x128xf32> to vector<8x32xf32>
    %20 = math.tanh %19 : vector<8x32xf32>
    %21 = vector.extract_strided_slice %18 {offsets = [0, 0], sizes = [8, 32], strides = [1, 1]} : vector<8x96xf32> to vector<8x32xf32>
    %22 = vector.extract_strided_slice %18 {offsets = [0, 32], sizes = [8, 32], strides = [1, 1]} : vector<8x96xf32> to vector<8x32xf32>
    %23 = vector.extract_strided_slice %18 {offsets = [0, 64], sizes = [8, 32], strides = [1, 1]} : vector<8x96xf32> to vector<8x32xf32>
    %24 = arith.mulf %22, %10 : vector<8x32xf32>
    %25 = arith.mulf %21, %20 : vector<8x32xf32>
    %26 = arith.addf %24, %25 : vector<8x32xf32>
    %27 = math.tanh %26 : vector<8x32xf32>
    %28 = arith.mulf %23, %27 : vector<8x32xf32>
    %29 = tpu.concatenate %28, %10 in 1 : vector<8x32xf32>, vector<8x32xf32> -> vector<8x64xf32>
    %30 = arith.truncf %29 : vector<8x64xf32> to vector<8x64xbf16>
    %cst_12 = arith.constant dense<0.000000e+00> : vector<8x256xf32>
    %31 = tpu.matmul %30, %0, %cst_12 {dimension_numbers = #tpu.dot_dimension_numbers<[1], [0], [0], [1], [0, 0, 1, 1], [], []>} : vector<8x64xbf16>, vector<64x256xbf16>, vector<8x256xf32> -> vector<8x256xf32>
    %32 = vector.extract_strided_slice %9 {offsets = [1, 0, 0], sizes = [1, 8, 128], strides = [1, 1, 1]} : vector<8x8x128xf32> to vector<1x8x128xf32>
    %33 = vector.shape_cast %32 : vector<1x8x128xf32> to vector<8x128xf32>
    %34 = vector.extract_strided_slice %31 {offsets = [0, 0], sizes = [8, 128], strides = [1, 1]} : vector<8x256xf32> to vector<8x128xf32>
    %35 = arith.addf %33, %34 : vector<8x128xf32>
    %36 = vector.extract_strided_slice %35 {offsets = [0, 0], sizes = [8, 96], strides = [1, 1]} : vector<8x128xf32> to vector<8x96xf32>
    %37 = arith.negf %36 : vector<8x96xf32>
    %38 = math.exp %37 : vector<8x96xf32>
    %cst_13 = arith.constant 1.000000e+00 : f32
    %39 = vector.broadcast %cst_13 : f32 to vector<8x96xf32>
    %40 = arith.addf %39, %38 : vector<8x96xf32>
    %41 = arith.divf %39, %40 : vector<8x96xf32>
    %42 = vector.extract_strided_slice %35 {offsets = [0, 96], sizes = [8, 32], strides = [1, 1]} : vector<8x128xf32> to vector<8x32xf32>
    %43 = math.tanh %42 : vector<8x32xf32>
    %44 = vector.extract_strided_slice %41 {offsets = [0, 0], sizes = [8, 32], strides = [1, 1]} : vector<8x96xf32> to vector<8x32xf32>
    %45 = vector.extract_strided_slice %41 {offsets = [0, 32], sizes = [8, 32], strides = [1, 1]} : vector<8x96xf32> to vector<8x32xf32>
    %46 = vector.extract_strided_slice %41 {offsets = [0, 64], sizes = [8, 32], strides = [1, 1]} : vector<8x96xf32> to vector<8x32xf32>
    %47 = arith.mulf %45, %26 : vector<8x32xf32>
    %48 = arith.mulf %44, %43 : vector<8x32xf32>
    %49 = arith.addf %47, %48 : vector<8x32xf32>
    %50 = math.tanh %49 : vector<8x32xf32>
    %51 = arith.mulf %46, %50 : vector<8x32xf32>
    %52 = vector.extract_strided_slice %31 {offsets = [0, 128], sizes = [8, 128], strides = [1, 1]} : vector<8x256xf32> to vector<8x128xf32>
    %53 = vector.broadcast %1 : vector<1x128xf32> to vector<8x128xf32>
    %54 = arith.addf %53, %52 : vector<8x128xf32>
    %55 = vector.extract_strided_slice %54 {offsets = [0, 0], sizes = [8, 96], strides = [1, 1]} : vector<8x128xf32> to vector<8x96xf32>
    %56 = arith.negf %55 : vector<8x96xf32>
    %57 = math.exp %56 : vector<8x96xf32>
    %cst_14 = arith.constant 1.000000e+00 : f32
    %58 = vector.broadcast %cst_14 : f32 to vector<8x96xf32>
    %59 = arith.addf %58, %57 : vector<8x96xf32>
    %60 = arith.divf %58, %59 : vector<8x96xf32>
    %61 = vector.extract_strided_slice %54 {offsets = [0, 96], sizes = [8, 32], strides = [1, 1]} : vector<8x128xf32> to vector<8x32xf32>
    %62 = math.tanh %61 : vector<8x32xf32>
    %63 = vector.extract_strided_slice %60 {offsets = [0, 0], sizes = [8, 32], strides = [1, 1]} : vector<8x96xf32> to vector<8x32xf32>
    %64 = vector.extract_strided_slice %60 {offsets = [0, 32], sizes = [8, 32], strides = [1, 1]} : vector<8x96xf32> to vector<8x32xf32>
    %65 = vector.extract_strided_slice %60 {offsets = [0, 64], sizes = [8, 32], strides = [1, 1]} : vector<8x96xf32> to vector<8x32xf32>
    %66 = arith.mulf %64, %10 : vector<8x32xf32>
    %67 = arith.mulf %63, %62 : vector<8x32xf32>
    %68 = arith.addf %66, %67 : vector<8x32xf32>
    %69 = math.tanh %68 : vector<8x32xf32>
    %70 = arith.mulf %65, %69 : vector<8x32xf32>
    %71 = tpu.concatenate %51, %70 in 1 : vector<8x32xf32>, vector<8x32xf32> -> vector<8x64xf32>
    %72 = arith.truncf %71 : vector<8x64xf32> to vector<8x64xbf16>
    %cst_15 = arith.constant dense<0.000000e+00> : vector<8x256xf32>
    %73 = tpu.matmul %72, %0, %cst_15 {dimension_numbers = #tpu.dot_dimension_numbers<[1], [0], [0], [1], [0, 0, 1, 1], [], []>} : vector<8x64xbf16>, vector<64x256xbf16>, vector<8x256xf32> -> vector<8x256xf32>
    %74 = vector.extract_strided_slice %9 {offsets = [2, 0, 0], sizes = [1, 8, 128], strides = [1, 1, 1]} : vector<8x8x128xf32> to vector<1x8x128xf32>
    %75 = vector.shape_cast %74 : vector<1x8x128xf32> to vector<8x128xf32>
    %76 = vector.extract_strided_slice %73 {offsets = [0, 0], sizes = [8, 128], strides = [1, 1]} : vector<8x256xf32> to vector<8x128xf32>
    %77 = arith.addf %75, %76 : vector<8x128xf32>
    %78 = vector.extract_strided_slice %77 {offsets = [0, 0], sizes = [8, 96], strides = [1, 1]} : vector<8x128xf32> to vector<8x96xf32>
    %79 = arith.negf %78 : vector<8x96xf32>
    %80 = math.exp %79 : vector<8x96xf32>
    %cst_16 = arith.constant 1.000000e+00 : f32
    %81 = vector.broadcast %cst_16 : f32 to vector<8x96xf32>
    %82 = arith.addf %81, %80 : vector<8x96xf32>
    %83 = arith.divf %81, %82 : vector<8x96xf32>
    %84 = vector.extract_strided_slice %77 {offsets = [0, 96], sizes = [8, 32], strides = [1, 1]} : vector<8x128xf32> to vector<8x32xf32>
    %85 = math.tanh %84 : vector<8x32xf32>
    %86 = vector.extract_strided_slice %83 {offsets = [0, 0], sizes = [8, 32], strides = [1, 1]} : vector<8x96xf32> to vector<8x32xf32>
    %87 = vector.extract_strided_slice %83 {offsets = [0, 32], sizes = [8, 32], strides = [1, 1]} : vector<8x96xf32> to vector<8x32xf32>
    %88 = vector.extract_strided_slice %83 {offsets = [0, 64], sizes = [8, 32], strides = [1, 1]} : vector<8x96xf32> to vector<8x32xf32>
    %89 = arith.mulf %87, %49 : vector<8x32xf32>
    %90 = arith.mulf %86, %85 : vector<8x32xf32>
    %91 = arith.addf %89, %90 : vector<8x32xf32>
    %92 = math.tanh %91 : vector<8x32xf32>
    %93 = arith.mulf %88, %92 : vector<8x32xf32>
    %94 = vector.extract_strided_slice %73 {offsets = [0, 128], sizes = [8, 128], strides = [1, 1]} : vector<8x256xf32> to vector<8x128xf32>
    %95 = vector.broadcast %1 : vector<1x128xf32> to vector<8x128xf32>
    %96 = arith.addf %95, %94 : vector<8x128xf32>
    %97 = vector.extract_strided_slice %96 {offsets = [0, 0], sizes = [8, 96], strides = [1, 1]} : vector<8x128xf32> to vector<8x96xf32>
    %98 = arith.negf %97 : vector<8x96xf32>
    %99 = math.exp %98 : vector<8x96xf32>
    %cst_17 = arith.constant 1.000000e+00 : f32
    %100 = vector.broadcast %cst_17 : f32 to vector<8x96xf32>
    %101 = arith.addf %100, %99 : vector<8x96xf32>
    %102 = arith.divf %100, %101 : vector<8x96xf32>
    %103 = vector.extract_strided_slice %96 {offsets = [0, 96], sizes = [8, 32], strides = [1, 1]} : vector<8x128xf32> to vector<8x32xf32>
    %104 = math.tanh %103 : vector<8x32xf32>
    %105 = vector.extract_strided_slice %102 {offsets = [0, 0], sizes = [8, 32], strides = [1, 1]} : vector<8x96xf32> to vector<8x32xf32>
    %106 = vector.extract_strided_slice %102 {offsets = [0, 32], sizes = [8, 32], strides = [1, 1]} : vector<8x96xf32> to vector<8x32xf32>
    %107 = vector.extract_strided_slice %102 {offsets = [0, 64], sizes = [8, 32], strides = [1, 1]} : vector<8x96xf32> to vector<8x32xf32>
    %108 = arith.mulf %106, %68 : vector<8x32xf32>
    %109 = arith.mulf %105, %104 : vector<8x32xf32>
    %110 = arith.addf %108, %109 : vector<8x32xf32>
    %111 = math.tanh %110 : vector<8x32xf32>
    %112 = arith.mulf %107, %111 : vector<8x32xf32>
    %113 = tpu.concatenate %93, %112 in 1 : vector<8x32xf32>, vector<8x32xf32> -> vector<8x64xf32>
    %114 = arith.truncf %113 : vector<8x64xf32> to vector<8x64xbf16>
    %cst_18 = arith.constant dense<0.000000e+00> : vector<8x256xf32>
    %115 = tpu.matmul %114, %0, %cst_18 {dimension_numbers = #tpu.dot_dimension_numbers<[1], [0], [0], [1], [0, 0, 1, 1], [], []>} : vector<8x64xbf16>, vector<64x256xbf16>, vector<8x256xf32> -> vector<8x256xf32>
    %116 = vector.extract_strided_slice %9 {offsets = [3, 0, 0], sizes = [1, 8, 128], strides = [1, 1, 1]} : vector<8x8x128xf32> to vector<1x8x128xf32>
    %117 = vector.shape_cast %116 : vector<1x8x128xf32> to vector<8x128xf32>
    %118 = vector.extract_strided_slice %115 {offsets = [0, 0], sizes = [8, 128], strides = [1, 1]} : vector<8x256xf32> to vector<8x128xf32>
    %119 = arith.addf %117, %118 : vector<8x128xf32>
    %120 = vector.extract_strided_slice %119 {offsets = [0, 0], sizes = [8, 96], strides = [1, 1]} : vector<8x128xf32> to vector<8x96xf32>
    %121 = arith.negf %120 : vector<8x96xf32>
    %122 = math.exp %121 : vector<8x96xf32>
    %cst_19 = arith.constant 1.000000e+00 : f32
    %123 = vector.broadcast %cst_19 : f32 to vector<8x96xf32>
    %124 = arith.addf %123, %122 : vector<8x96xf32>
    %125 = arith.divf %123, %124 : vector<8x96xf32>
    %126 = vector.extract_strided_slice %119 {offsets = [0, 96], sizes = [8, 32], strides = [1, 1]} : vector<8x128xf32> to vector<8x32xf32>
    %127 = math.tanh %126 : vector<8x32xf32>
    %128 = vector.extract_strided_slice %125 {offsets = [0, 0], sizes = [8, 32], strides = [1, 1]} : vector<8x96xf32> to vector<8x32xf32>
    %129 = vector.extract_strided_slice %125 {offsets = [0, 32], sizes = [8, 32], strides = [1, 1]} : vector<8x96xf32> to vector<8x32xf32>
    %130 = vector.extract_strided_slice %125 {offsets = [0, 64], sizes = [8, 32], strides = [1, 1]} : vector<8x96xf32> to vector<8x32xf32>
    %131 = arith.mulf %129, %91 : vector<8x32xf32>
    %132 = arith.mulf %128, %127 : vector<8x32xf32>
    %133 = arith.addf %131, %132 : vector<8x32xf32>
    %134 = math.tanh %133 : vector<8x32xf32>
    %135 = arith.mulf %130, %134 : vector<8x32xf32>
    %136 = vector.extract_strided_slice %115 {offsets = [0, 128], sizes = [8, 128], strides = [1, 1]} : vector<8x256xf32> to vector<8x128xf32>
    %137 = vector.broadcast %1 : vector<1x128xf32> to vector<8x128xf32>
    %138 = arith.addf %137, %136 : vector<8x128xf32>
    %139 = vector.extract_strided_slice %138 {offsets = [0, 0], sizes = [8, 96], strides = [1, 1]} : vector<8x128xf32> to vector<8x96xf32>
    %140 = arith.negf %139 : vector<8x96xf32>
    %141 = math.exp %140 : vector<8x96xf32>
    %cst_20 = arith.constant 1.000000e+00 : f32
    %142 = vector.broadcast %cst_20 : f32 to vector<8x96xf32>
    %143 = arith.addf %142, %141 : vector<8x96xf32>
    %144 = arith.divf %142, %143 : vector<8x96xf32>
    %145 = vector.extract_strided_slice %138 {offsets = [0, 96], sizes = [8, 32], strides = [1, 1]} : vector<8x128xf32> to vector<8x32xf32>
    %146 = math.tanh %145 : vector<8x32xf32>
    %147 = vector.extract_strided_slice %144 {offsets = [0, 0], sizes = [8, 32], strides = [1, 1]} : vector<8x96xf32> to vector<8x32xf32>
    %148 = vector.extract_strided_slice %144 {offsets = [0, 32], sizes = [8, 32], strides = [1, 1]} : vector<8x96xf32> to vector<8x32xf32>
    %149 = vector.extract_strided_slice %144 {offsets = [0, 64], sizes = [8, 32], strides = [1, 1]} : vector<8x96xf32> to vector<8x32xf32>
    %150 = arith.mulf %148, %110 : vector<8x32xf32>
    %151 = arith.mulf %147, %146 : vector<8x32xf32>
    %152 = arith.addf %150, %151 : vector<8x32xf32>
    %153 = math.tanh %152 : vector<8x32xf32>
    %154 = arith.mulf %149, %153 : vector<8x32xf32>
    %155 = tpu.concatenate %135, %154 in 1 : vector<8x32xf32>, vector<8x32xf32> -> vector<8x64xf32>
    %156 = arith.truncf %155 : vector<8x64xf32> to vector<8x64xbf16>
    %cst_21 = arith.constant dense<0.000000e+00> : vector<8x256xf32>
    %157 = tpu.matmul %156, %0, %cst_21 {dimension_numbers = #tpu.dot_dimension_numbers<[1], [0], [0], [1], [0, 0, 1, 1], [], []>} : vector<8x64xbf16>, vector<64x256xbf16>, vector<8x256xf32> -> vector<8x256xf32>
    %158 = vector.extract_strided_slice %9 {offsets = [4, 0, 0], sizes = [1, 8, 128], strides = [1, 1, 1]} : vector<8x8x128xf32> to vector<1x8x128xf32>
    %159 = vector.shape_cast %158 : vector<1x8x128xf32> to vector<8x128xf32>
    %160 = vector.extract_strided_slice %157 {offsets = [0, 0], sizes = [8, 128], strides = [1, 1]} : vector<8x256xf32> to vector<8x128xf32>
    %161 = arith.addf %159, %160 : vector<8x128xf32>
    %162 = vector.extract_strided_slice %161 {offsets = [0, 0], sizes = [8, 96], strides = [1, 1]} : vector<8x128xf32> to vector<8x96xf32>
    %163 = arith.negf %162 : vector<8x96xf32>
    %164 = math.exp %163 : vector<8x96xf32>
    %cst_22 = arith.constant 1.000000e+00 : f32
    %165 = vector.broadcast %cst_22 : f32 to vector<8x96xf32>
    %166 = arith.addf %165, %164 : vector<8x96xf32>
    %167 = arith.divf %165, %166 : vector<8x96xf32>
    %168 = vector.extract_strided_slice %161 {offsets = [0, 96], sizes = [8, 32], strides = [1, 1]} : vector<8x128xf32> to vector<8x32xf32>
    %169 = math.tanh %168 : vector<8x32xf32>
    %170 = vector.extract_strided_slice %167 {offsets = [0, 0], sizes = [8, 32], strides = [1, 1]} : vector<8x96xf32> to vector<8x32xf32>
    %171 = vector.extract_strided_slice %167 {offsets = [0, 32], sizes = [8, 32], strides = [1, 1]} : vector<8x96xf32> to vector<8x32xf32>
    %172 = vector.extract_strided_slice %167 {offsets = [0, 64], sizes = [8, 32], strides = [1, 1]} : vector<8x96xf32> to vector<8x32xf32>
    %173 = arith.mulf %171, %133 : vector<8x32xf32>
    %174 = arith.mulf %170, %169 : vector<8x32xf32>
    %175 = arith.addf %173, %174 : vector<8x32xf32>
    %176 = math.tanh %175 : vector<8x32xf32>
    %177 = arith.mulf %172, %176 : vector<8x32xf32>
    %178 = vector.extract_strided_slice %157 {offsets = [0, 128], sizes = [8, 128], strides = [1, 1]} : vector<8x256xf32> to vector<8x128xf32>
    %179 = vector.broadcast %1 : vector<1x128xf32> to vector<8x128xf32>
    %180 = arith.addf %179, %178 : vector<8x128xf32>
    %181 = vector.extract_strided_slice %180 {offsets = [0, 0], sizes = [8, 96], strides = [1, 1]} : vector<8x128xf32> to vector<8x96xf32>
    %182 = arith.negf %181 : vector<8x96xf32>
    %183 = math.exp %182 : vector<8x96xf32>
    %cst_23 = arith.constant 1.000000e+00 : f32
    %184 = vector.broadcast %cst_23 : f32 to vector<8x96xf32>
    %185 = arith.addf %184, %183 : vector<8x96xf32>
    %186 = arith.divf %184, %185 : vector<8x96xf32>
    %187 = vector.extract_strided_slice %180 {offsets = [0, 96], sizes = [8, 32], strides = [1, 1]} : vector<8x128xf32> to vector<8x32xf32>
    %188 = math.tanh %187 : vector<8x32xf32>
    %189 = vector.extract_strided_slice %186 {offsets = [0, 0], sizes = [8, 32], strides = [1, 1]} : vector<8x96xf32> to vector<8x32xf32>
    %190 = vector.extract_strided_slice %186 {offsets = [0, 32], sizes = [8, 32], strides = [1, 1]} : vector<8x96xf32> to vector<8x32xf32>
    %191 = vector.extract_strided_slice %186 {offsets = [0, 64], sizes = [8, 32], strides = [1, 1]} : vector<8x96xf32> to vector<8x32xf32>
    %192 = arith.mulf %190, %152 : vector<8x32xf32>
    %193 = arith.mulf %189, %188 : vector<8x32xf32>
    %194 = arith.addf %192, %193 : vector<8x32xf32>
    %195 = math.tanh %194 : vector<8x32xf32>
    %196 = arith.mulf %191, %195 : vector<8x32xf32>
    %197 = tpu.concatenate %177, %196 in 1 : vector<8x32xf32>, vector<8x32xf32> -> vector<8x64xf32>
    %198 = arith.truncf %197 : vector<8x64xf32> to vector<8x64xbf16>
    %cst_24 = arith.constant dense<0.000000e+00> : vector<8x256xf32>
    %199 = tpu.matmul %198, %0, %cst_24 {dimension_numbers = #tpu.dot_dimension_numbers<[1], [0], [0], [1], [0, 0, 1, 1], [], []>} : vector<8x64xbf16>, vector<64x256xbf16>, vector<8x256xf32> -> vector<8x256xf32>
    %200 = vector.extract_strided_slice %9 {offsets = [5, 0, 0], sizes = [1, 8, 128], strides = [1, 1, 1]} : vector<8x8x128xf32> to vector<1x8x128xf32>
    %201 = vector.shape_cast %200 : vector<1x8x128xf32> to vector<8x128xf32>
    %202 = vector.extract_strided_slice %199 {offsets = [0, 0], sizes = [8, 128], strides = [1, 1]} : vector<8x256xf32> to vector<8x128xf32>
    %203 = arith.addf %201, %202 : vector<8x128xf32>
    %204 = vector.extract_strided_slice %203 {offsets = [0, 0], sizes = [8, 96], strides = [1, 1]} : vector<8x128xf32> to vector<8x96xf32>
    %205 = arith.negf %204 : vector<8x96xf32>
    %206 = math.exp %205 : vector<8x96xf32>
    %cst_25 = arith.constant 1.000000e+00 : f32
    %207 = vector.broadcast %cst_25 : f32 to vector<8x96xf32>
    %208 = arith.addf %207, %206 : vector<8x96xf32>
    %209 = arith.divf %207, %208 : vector<8x96xf32>
    %210 = vector.extract_strided_slice %203 {offsets = [0, 96], sizes = [8, 32], strides = [1, 1]} : vector<8x128xf32> to vector<8x32xf32>
    %211 = math.tanh %210 : vector<8x32xf32>
    %212 = vector.extract_strided_slice %209 {offsets = [0, 0], sizes = [8, 32], strides = [1, 1]} : vector<8x96xf32> to vector<8x32xf32>
    %213 = vector.extract_strided_slice %209 {offsets = [0, 32], sizes = [8, 32], strides = [1, 1]} : vector<8x96xf32> to vector<8x32xf32>
    %214 = vector.extract_strided_slice %209 {offsets = [0, 64], sizes = [8, 32], strides = [1, 1]} : vector<8x96xf32> to vector<8x32xf32>
    %215 = arith.mulf %213, %175 : vector<8x32xf32>
    %216 = arith.mulf %212, %211 : vector<8x32xf32>
    %217 = arith.addf %215, %216 : vector<8x32xf32>
    %218 = math.tanh %217 : vector<8x32xf32>
    %219 = arith.mulf %214, %218 : vector<8x32xf32>
    %220 = vector.extract_strided_slice %199 {offsets = [0, 128], sizes = [8, 128], strides = [1, 1]} : vector<8x256xf32> to vector<8x128xf32>
    %221 = vector.broadcast %1 : vector<1x128xf32> to vector<8x128xf32>
    %222 = arith.addf %221, %220 : vector<8x128xf32>
    %223 = vector.extract_strided_slice %222 {offsets = [0, 0], sizes = [8, 96], strides = [1, 1]} : vector<8x128xf32> to vector<8x96xf32>
    %224 = arith.negf %223 : vector<8x96xf32>
    %225 = math.exp %224 : vector<8x96xf32>
    %cst_26 = arith.constant 1.000000e+00 : f32
    %226 = vector.broadcast %cst_26 : f32 to vector<8x96xf32>
    %227 = arith.addf %226, %225 : vector<8x96xf32>
    %228 = arith.divf %226, %227 : vector<8x96xf32>
    %229 = vector.extract_strided_slice %222 {offsets = [0, 96], sizes = [8, 32], strides = [1, 1]} : vector<8x128xf32> to vector<8x32xf32>
    %230 = math.tanh %229 : vector<8x32xf32>
    %231 = vector.extract_strided_slice %228 {offsets = [0, 0], sizes = [8, 32], strides = [1, 1]} : vector<8x96xf32> to vector<8x32xf32>
    %232 = vector.extract_strided_slice %228 {offsets = [0, 32], sizes = [8, 32], strides = [1, 1]} : vector<8x96xf32> to vector<8x32xf32>
    %233 = vector.extract_strided_slice %228 {offsets = [0, 64], sizes = [8, 32], strides = [1, 1]} : vector<8x96xf32> to vector<8x32xf32>
    %234 = arith.mulf %232, %194 : vector<8x32xf32>
    %235 = arith.mulf %231, %230 : vector<8x32xf32>
    %236 = arith.addf %234, %235 : vector<8x32xf32>
    %237 = math.tanh %236 : vector<8x32xf32>
    %238 = arith.mulf %233, %237 : vector<8x32xf32>
    %239 = tpu.concatenate %219, %238 in 1 : vector<8x32xf32>, vector<8x32xf32> -> vector<8x64xf32>
    %240 = arith.truncf %239 : vector<8x64xf32> to vector<8x64xbf16>
    %cst_27 = arith.constant dense<0.000000e+00> : vector<8x256xf32>
    %241 = tpu.matmul %240, %0, %cst_27 {dimension_numbers = #tpu.dot_dimension_numbers<[1], [0], [0], [1], [0, 0, 1, 1], [], []>} : vector<8x64xbf16>, vector<64x256xbf16>, vector<8x256xf32> -> vector<8x256xf32>
    %242 = vector.extract_strided_slice %9 {offsets = [6, 0, 0], sizes = [1, 8, 128], strides = [1, 1, 1]} : vector<8x8x128xf32> to vector<1x8x128xf32>
    %243 = vector.shape_cast %242 : vector<1x8x128xf32> to vector<8x128xf32>
    %244 = vector.extract_strided_slice %241 {offsets = [0, 0], sizes = [8, 128], strides = [1, 1]} : vector<8x256xf32> to vector<8x128xf32>
    %245 = arith.addf %243, %244 : vector<8x128xf32>
    %246 = vector.extract_strided_slice %245 {offsets = [0, 0], sizes = [8, 96], strides = [1, 1]} : vector<8x128xf32> to vector<8x96xf32>
    %247 = arith.negf %246 : vector<8x96xf32>
    %248 = math.exp %247 : vector<8x96xf32>
    %cst_28 = arith.constant 1.000000e+00 : f32
    %249 = vector.broadcast %cst_28 : f32 to vector<8x96xf32>
    %250 = arith.addf %249, %248 : vector<8x96xf32>
    %251 = arith.divf %249, %250 : vector<8x96xf32>
    %252 = vector.extract_strided_slice %245 {offsets = [0, 96], sizes = [8, 32], strides = [1, 1]} : vector<8x128xf32> to vector<8x32xf32>
    %253 = math.tanh %252 : vector<8x32xf32>
    %254 = vector.extract_strided_slice %251 {offsets = [0, 0], sizes = [8, 32], strides = [1, 1]} : vector<8x96xf32> to vector<8x32xf32>
    %255 = vector.extract_strided_slice %251 {offsets = [0, 32], sizes = [8, 32], strides = [1, 1]} : vector<8x96xf32> to vector<8x32xf32>
    %256 = vector.extract_strided_slice %251 {offsets = [0, 64], sizes = [8, 32], strides = [1, 1]} : vector<8x96xf32> to vector<8x32xf32>
    %257 = arith.mulf %255, %217 : vector<8x32xf32>
    %258 = arith.mulf %254, %253 : vector<8x32xf32>
    %259 = arith.addf %257, %258 : vector<8x32xf32>
    %260 = math.tanh %259 : vector<8x32xf32>
    %261 = arith.mulf %256, %260 : vector<8x32xf32>
    %262 = vector.extract_strided_slice %241 {offsets = [0, 128], sizes = [8, 128], strides = [1, 1]} : vector<8x256xf32> to vector<8x128xf32>
    %263 = vector.broadcast %1 : vector<1x128xf32> to vector<8x128xf32>
    %264 = arith.addf %263, %262 : vector<8x128xf32>
    %265 = vector.extract_strided_slice %264 {offsets = [0, 0], sizes = [8, 96], strides = [1, 1]} : vector<8x128xf32> to vector<8x96xf32>
    %266 = arith.negf %265 : vector<8x96xf32>
    %267 = math.exp %266 : vector<8x96xf32>
    %cst_29 = arith.constant 1.000000e+00 : f32
    %268 = vector.broadcast %cst_29 : f32 to vector<8x96xf32>
    %269 = arith.addf %268, %267 : vector<8x96xf32>
    %270 = arith.divf %268, %269 : vector<8x96xf32>
    %271 = vector.extract_strided_slice %264 {offsets = [0, 96], sizes = [8, 32], strides = [1, 1]} : vector<8x128xf32> to vector<8x32xf32>
    %272 = math.tanh %271 : vector<8x32xf32>
    %273 = vector.extract_strided_slice %270 {offsets = [0, 0], sizes = [8, 32], strides = [1, 1]} : vector<8x96xf32> to vector<8x32xf32>
    %274 = vector.extract_strided_slice %270 {offsets = [0, 32], sizes = [8, 32], strides = [1, 1]} : vector<8x96xf32> to vector<8x32xf32>
    %275 = vector.extract_strided_slice %270 {offsets = [0, 64], sizes = [8, 32], strides = [1, 1]} : vector<8x96xf32> to vector<8x32xf32>
    %276 = arith.mulf %274, %236 : vector<8x32xf32>
    %277 = arith.mulf %273, %272 : vector<8x32xf32>
    %278 = arith.addf %276, %277 : vector<8x32xf32>
    %279 = math.tanh %278 : vector<8x32xf32>
    %280 = arith.mulf %275, %279 : vector<8x32xf32>
    %281 = tpu.concatenate %261, %280 in 1 : vector<8x32xf32>, vector<8x32xf32> -> vector<8x64xf32>
    %282 = arith.truncf %281 : vector<8x64xf32> to vector<8x64xbf16>
    %cst_30 = arith.constant dense<0.000000e+00> : vector<8x256xf32>
    %283 = tpu.matmul %282, %0, %cst_30 {dimension_numbers = #tpu.dot_dimension_numbers<[1], [0], [0], [1], [0, 0, 1, 1], [], []>} : vector<8x64xbf16>, vector<64x256xbf16>, vector<8x256xf32> -> vector<8x256xf32>
    %284 = vector.extract_strided_slice %9 {offsets = [7, 0, 0], sizes = [1, 8, 128], strides = [1, 1, 1]} : vector<8x8x128xf32> to vector<1x8x128xf32>
    %285 = vector.shape_cast %284 : vector<1x8x128xf32> to vector<8x128xf32>
    %286 = vector.extract_strided_slice %283 {offsets = [0, 0], sizes = [8, 128], strides = [1, 1]} : vector<8x256xf32> to vector<8x128xf32>
    %287 = arith.addf %285, %286 : vector<8x128xf32>
    %288 = vector.extract_strided_slice %287 {offsets = [0, 0], sizes = [8, 96], strides = [1, 1]} : vector<8x128xf32> to vector<8x96xf32>
    %289 = arith.negf %288 : vector<8x96xf32>
    %290 = math.exp %289 : vector<8x96xf32>
    %cst_31 = arith.constant 1.000000e+00 : f32
    %291 = vector.broadcast %cst_31 : f32 to vector<8x96xf32>
    %292 = arith.addf %291, %290 : vector<8x96xf32>
    %293 = arith.divf %291, %292 : vector<8x96xf32>
    %294 = vector.extract_strided_slice %287 {offsets = [0, 96], sizes = [8, 32], strides = [1, 1]} : vector<8x128xf32> to vector<8x32xf32>
    %295 = math.tanh %294 : vector<8x32xf32>
    %296 = vector.extract_strided_slice %293 {offsets = [0, 0], sizes = [8, 32], strides = [1, 1]} : vector<8x96xf32> to vector<8x32xf32>
    %297 = vector.extract_strided_slice %293 {offsets = [0, 32], sizes = [8, 32], strides = [1, 1]} : vector<8x96xf32> to vector<8x32xf32>
    %298 = vector.extract_strided_slice %293 {offsets = [0, 64], sizes = [8, 32], strides = [1, 1]} : vector<8x96xf32> to vector<8x32xf32>
    %299 = arith.mulf %297, %259 : vector<8x32xf32>
    %300 = arith.mulf %296, %295 : vector<8x32xf32>
    %301 = arith.addf %299, %300 : vector<8x32xf32>
    %302 = math.tanh %301 : vector<8x32xf32>
    %303 = arith.mulf %298, %302 : vector<8x32xf32>
    %304 = vector.extract_strided_slice %283 {offsets = [0, 128], sizes = [8, 128], strides = [1, 1]} : vector<8x256xf32> to vector<8x128xf32>
    %305 = vector.broadcast %1 : vector<1x128xf32> to vector<8x128xf32>
    %306 = arith.addf %305, %304 : vector<8x128xf32>
    %307 = vector.extract_strided_slice %306 {offsets = [0, 0], sizes = [8, 96], strides = [1, 1]} : vector<8x128xf32> to vector<8x96xf32>
    %308 = arith.negf %307 : vector<8x96xf32>
    %309 = math.exp %308 : vector<8x96xf32>
    %cst_32 = arith.constant 1.000000e+00 : f32
    %310 = vector.broadcast %cst_32 : f32 to vector<8x96xf32>
    %311 = arith.addf %310, %309 : vector<8x96xf32>
    %312 = arith.divf %310, %311 : vector<8x96xf32>
    %313 = vector.extract_strided_slice %306 {offsets = [0, 96], sizes = [8, 32], strides = [1, 1]} : vector<8x128xf32> to vector<8x32xf32>
    %314 = math.tanh %313 : vector<8x32xf32>
    %315 = vector.extract_strided_slice %312 {offsets = [0, 0], sizes = [8, 32], strides = [1, 1]} : vector<8x96xf32> to vector<8x32xf32>
    %316 = vector.extract_strided_slice %312 {offsets = [0, 32], sizes = [8, 32], strides = [1, 1]} : vector<8x96xf32> to vector<8x32xf32>
    %317 = vector.extract_strided_slice %312 {offsets = [0, 64], sizes = [8, 32], strides = [1, 1]} : vector<8x96xf32> to vector<8x32xf32>
    %318 = arith.mulf %316, %278 : vector<8x32xf32>
    %319 = arith.mulf %315, %314 : vector<8x32xf32>
    %320 = arith.addf %318, %319 : vector<8x32xf32>
    %321 = math.tanh %320 : vector<8x32xf32>
    %322 = arith.mulf %317, %321 : vector<8x32xf32>
    %323 = tpu.concatenate %303, %322 in 1 : vector<8x32xf32>, vector<8x32xf32> -> vector<8x64xf32>
    %324 = arith.truncf %323 : vector<8x64xf32> to vector<8x64xbf16>
    %cst_33 = arith.constant dense<0.000000e+00> : vector<8x256xf32>
    %325 = tpu.matmul %324, %0, %cst_33 {dimension_numbers = #tpu.dot_dimension_numbers<[1], [0], [0], [1], [0, 0, 1, 1], [], []>} : vector<8x64xbf16>, vector<64x256xbf16>, vector<8x256xf32> -> vector<8x256xf32>
    %326 = vector.extract_strided_slice %325 {offsets = [0, 128], sizes = [8, 128], strides = [1, 1]} : vector<8x256xf32> to vector<8x128xf32>
    %327 = vector.broadcast %1 : vector<1x128xf32> to vector<8x128xf32>
    %328 = arith.addf %327, %326 : vector<8x128xf32>
    %329 = vector.extract_strided_slice %328 {offsets = [0, 0], sizes = [8, 96], strides = [1, 1]} : vector<8x128xf32> to vector<8x96xf32>
    %330 = arith.negf %329 : vector<8x96xf32>
    %331 = math.exp %330 : vector<8x96xf32>
    %cst_34 = arith.constant 1.000000e+00 : f32
    %332 = vector.broadcast %cst_34 : f32 to vector<8x96xf32>
    %333 = arith.addf %332, %331 : vector<8x96xf32>
    %334 = arith.divf %332, %333 : vector<8x96xf32>
    %335 = vector.extract_strided_slice %328 {offsets = [0, 96], sizes = [8, 32], strides = [1, 1]} : vector<8x128xf32> to vector<8x32xf32>
    %336 = math.tanh %335 : vector<8x32xf32>
    %337 = vector.extract_strided_slice %334 {offsets = [0, 0], sizes = [8, 32], strides = [1, 1]} : vector<8x96xf32> to vector<8x32xf32>
    %338 = vector.extract_strided_slice %334 {offsets = [0, 32], sizes = [8, 32], strides = [1, 1]} : vector<8x96xf32> to vector<8x32xf32>
    %339 = vector.extract_strided_slice %334 {offsets = [0, 64], sizes = [8, 32], strides = [1, 1]} : vector<8x96xf32> to vector<8x32xf32>
    %340 = arith.mulf %338, %320 : vector<8x32xf32>
    %341 = arith.mulf %337, %336 : vector<8x32xf32>
    %342 = arith.addf %340, %341 : vector<8x32xf32>
    %343 = math.tanh %342 : vector<8x32xf32>
    %344 = arith.mulf %339, %343 : vector<8x32xf32>
    %c0_35 = arith.constant 0 : index
    %c0_36 = arith.constant 0 : index
    %345 = vector.load %arg6[%c0_35, %c0_36] : memref<32x1xf32, #tpu.memory_space<vmem>>, vector<32x1xf32>
    %cst_37 = arith.constant dense<0.000000e+00> : vector<8x1xf32>
    %346 = tpu.matmul %344, %345, %cst_37 {dimension_numbers = #tpu.dot_dimension_numbers<[1], [0], [0], [1], [0, 0, 1, 1], [], []>} : vector<8x32xf32>, vector<32x1xf32>, vector<8x1xf32> -> vector<8x1xf32>
    %c0_38 = arith.constant 0 : index
    %c0_39 = arith.constant 0 : index
    %347 = vector.load %arg7[%c0_38, %c0_39] : memref<1x1xf32, #tpu.memory_space<vmem>>, vector<1x1xf32>
    %348 = vector.broadcast %347 : vector<1x1xf32> to vector<8x1xf32>
    %349 = arith.addf %346, %348 : vector<8x1xf32>
    %c0_40 = arith.constant 0 : index
    %c0_41 = arith.constant 0 : index
    %350 = vector.load %arg8[%c0_40, %c0_41] : memref<8x1xf32, #tpu.memory_space<vmem>>, vector<8x1xf32>
    tpu.vector_store %arg8[%c0_40, %c0_41], %349 {strides = array<i32>} : memref<8x1xf32, #tpu.memory_space<vmem>>, vector<8x1xf32>,
    return
  }
  func.func @transform_0(%arg0: i32) -> (i32, i32, i32) {
    %c0_i32 = arith.constant 0 : i32
    %c0_i32_0 = arith.constant 0 : i32
    %c0_i32_1 = arith.constant 0 : i32
    return %c0_i32, %arg0, %c0_i32_0 : i32, i32, i32
  }
  func.func @transform_1(%arg0: i32) -> (i32, i32) {
    %c0_i32 = arith.constant 0 : i32
    %c0_i32_0 = arith.constant 0 : i32
    %c0_i32_1 = arith.constant 0 : i32
    return %c0_i32, %c0_i32_0 : i32, i32
  }
  func.func @transform_2(%arg0: i32) -> (i32, i32) {
    %c0_i32 = arith.constant 0 : i32
    %c0_i32_0 = arith.constant 0 : i32
    %c0_i32_1 = arith.constant 0 : i32
    return %c0_i32, %c0_i32_0 : i32, i32
  }
  func.func @transform_3(%arg0: i32) -> (i32, i32) {
    %c0_i32 = arith.constant 0 : i32
    %c0_i32_0 = arith.constant 0 : i32
    %c0_i32_1 = arith.constant 0 : i32
    return %c0_i32, %c0_i32_0 : i32, i32
  }
  func.func @transform_4(%arg0: i32) -> (i32, i32) {
    %c0_i32 = arith.constant 0 : i32
    %c0_i32_0 = arith.constant 0 : i32
    %c0_i32_1 = arith.constant 0 : i32
    return %c0_i32, %c0_i32_0 : i32, i32
  }
  func.func @transform_5(%arg0: i32) -> (i32, i32) {
    %c0_i32 = arith.constant 0 : i32
    %c0_i32_0 = arith.constant 0 : i32
    %c0_i32_1 = arith.constant 0 : i32
    return %c0_i32, %c0_i32_0 : i32, i32
  }
  func.func @transform_6(%arg0: i32) -> (i32, i32) {
    %c0_i32 = arith.constant 0 : i32
    %c0_i32_0 = arith.constant 0 : i32
    %c0_i32_1 = arith.constant 0 : i32
    return %c0_i32, %c0_i32_0 : i32, i32
  }
  func.func @transform_7(%arg0: i32) -> (i32, i32) {
    %c0_i32 = arith.constant 0 : i32
    %c0_i32_0 = arith.constant 0 : i32
    return %arg0, %c0_i32 : i32, i32
  }
}

</mosaic_0001>

<llo_original>
// kernel: tpu_custom_call.1
$region0: #{tpu_custom_call.1}
  #allocation0 [shape = 'u32[]', space=smem, size = 0x4, offset = 0x4, fixed_abs, tag = 'smem constant byte address 0x4 - core index']
  #allocation1 [shape = 'u32[72,128]{1,0:T(1,128)}', space=vmem, size = 0x9000, scoped, tag = 'internal scratch']
  #allocation2 [shape = 'f32[1,1]{1,0:T(1,128)S(1)}', space=vmem, size = 0x200, scoped, tag = 'scoped memory for tpu_custom_call.1']
  %s0 = inlined_call_operand.vmem [shape: bf16[8,8,6], index: 0, kind: input, shape index: {}]
  %s1 = inlined_call_operand.vmem [shape: bf16[6,128], index: 1, kind: input, shape index: {}]
  %s2 = inlined_call_operand.vmem [shape: f32[1,128], index: 2, kind: input, shape index: {}]
  %s3 = inlined_call_operand.vmem [shape: bf16[64,256], index: 3, kind: input, shape index: {}]
  %s4 = inlined_call_operand.vmem [shape: f32[1,128], index: 4, kind: input, shape index: {}]
  %s5 = inlined_call_operand.vmem [shape: f32[32,1], index: 5, kind: input, shape index: {}]
  %s6 = inlined_call_operand.<no memory space> [shape: f32[1,1], index: 6, kind: input, shape index: {}]
  %s7 = inlined_call_operand.vmem [shape: f32[8,1], index: 7, kind: output, shape index: {}]
  %s8 = sld [smem:[#allocation0]]
  $region38: #{tpu_custom_call.1} parent=0
    _
  %s10 = ssub.s32 1, %s8
  %s11 = scalar_select 0, %s10, %s8
  %v12 = vstv %s6
  %13 = vst [vmem:[#allocation2] sm:$0x1] %v12
  // Predicated region
  $region2: #{tpu_custom_call.1} parent=0 // pred_check
    _
  $region3: #{tpu_custom_call.1} parent=0 // pred_check_branch
    %15 = sbr.rel (0) target = $region5
  $region4: #{tpu_custom_call.1} parent=0 // pred_region
    _
  $region5: #{tpu_custom_call.1} parent=0 // pred_fallthru
    _
  // Predicated region
  $region6: #{tpu_custom_call.1} parent=0 // pred_check
    _
  $region7: #{tpu_custom_call.1} parent=0 // pred_check_branch
    %17 = sbr.rel (0) target = $region9
  $region8: #{tpu_custom_call.1} parent=0 // pred_region
    _
  $region9: #{tpu_custom_call.1} parent=0 // pred_fallthru
    _
  // Predicated region
  $region10: #{tpu_custom_call.1} parent=0 // pred_check
    _
  $region11: #{tpu_custom_call.1} parent=0 // pred_check_branch
    %19 = sbr.rel (0) target = $region13
  $region12: #{tpu_custom_call.1} parent=0 // pred_region
    _
  $region13: #{tpu_custom_call.1} parent=0 // pred_fallthru
    _
  // Predicated region
  $region14: #{tpu_custom_call.1} parent=0 // pred_check
    _
  $region15: #{tpu_custom_call.1} parent=0 // pred_check_branch
    %21 = sbr.rel (0) target = $region17
  $region16: #{tpu_custom_call.1} parent=0 // pred_region
    _
  $region17: #{tpu_custom_call.1} parent=0 // pred_fallthru
    _
  // Predicated region
  $region18: #{tpu_custom_call.1} parent=0 // pred_check
    _
  $region19: #{tpu_custom_call.1} parent=0 // pred_check_branch
    %23 = sbr.rel (0) target = $region21
  $region20: #{tpu_custom_call.1} parent=0 // pred_region
    _
  $region21: #{tpu_custom_call.1} parent=0 // pred_fallthru
    _
  // Predicated region
  $region22: #{tpu_custom_call.1} parent=0 // pred_check
    _
  $region23: #{tpu_custom_call.1} parent=0 // pred_check_branch
    %25 = sbr.rel (0) target = $region25
  $region24: #{tpu_custom_call.1} parent=0 // pred_region
    _
  $region25: #{tpu_custom_call.1} parent=0 // pred_fallthru
    _
  // Predicated region
  $region26: #{tpu_custom_call.1} parent=0 // pred_check
    _
  $region27: #{tpu_custom_call.1} parent=0 // pred_check_branch
    %27 = sbr.rel (0) target = $region29
  $region28: #{tpu_custom_call.1} parent=0 // pred_region
    _
  $region29: #{tpu_custom_call.1} parent=0 // pred_fallthru
    _
  %v29 = vld [vmem:[%s3] sm:$0xff]
  %v30 = vld [vmem:[%s3 + $0x8] sm:$0xff]
  %v31 = vld [vmem:[%s3 + $0x10] sm:$0xff]
  %v32 = vld [vmem:[%s3 + $0x18] sm:$0xff]
  %v33 = vld [vmem:[%s3 + $0x20] sm:$0xff]
  %v34 = vld [vmem:[%s3 + $0x28] sm:$0xff]
  %v35 = vld [vmem:[%s3 + $0x30] sm:$0xff]
  %v36 = vld [vmem:[%s3 + $0x38] sm:$0xff]
  %v37 = vld [vmem:[%s4] sm:$0x1]
  %v38 = vld [vmem:[%s0] sm:$0xf]
  %v39 = vld [vmem:[%s0 + $0x4] sm:$0xf]
  %v40 = vld [vmem:[%s0 + $0x8] sm:$0xf]
  %v41 = vld [vmem:[%s0 + $0xc] sm:$0xf]
  %v42 = vld [vmem:[%s0 + $0x10] sm:$0xf]
  %v43 = vld [vmem:[%s0 + $0x14] sm:$0xf]
  %v44 = vld [vmem:[%s0 + $0x18] sm:$0xf]
  %v45 = vld [vmem:[%s0 + $0x1c] sm:$0xf]
  %v46 = vld [vmem:[%s1] sm:$0x7]
  %v47 = vld [vmem:[%s2] sm:$0x1]
  %v49 = vperm.slane %v47, 0
  %v59 = vunpack.c.l.b16 %v38
  %v60 = vunpack.c.l.b16 %v39
  %v61 = vunpack.c.l.b16 %v40
  %v62 = vunpack.c.l.b16 %v41
  %v63 = vunpack.c.l.b16 %v42
  %v64 = vunpack.c.l.b16 %v43
  %v65 = vunpack.c.l.b16 %v44
  %v66 = vunpack.c.l.b16 %v45
  %v67 = vpack.c.b16 %v60, %v59
  %v68 = vpack.c.b16 %v62, %v61
  %v69 = vpack.c.b16 %v64, %v63
  %v70 = vpack.c.b16 %v66, %v65
  %vm71 = vcmask 48128
  %v73 = vsel %vm71, %v67, 0
  %v76 = vsel %vm71, %v68, 0
  %v79 = vsel %vm71, %v69, 0
  %v82 = vsel %vm71, %v70, 0
  %vm84 = vcmask 1042432
  %v86 = vsel %vm84, %v46, 0
  %88 = vmatpush.bf16.msra.mxu0 0
  %89 = vmatpush.bf16.msra.mxu0 0
  %90 = vmatpush.bf16.msra.mxu0 0
  %91 = vmatpush.bf16.msra.mxu0 0
  %92 = vmatpush.bf16.msra.mxu0 0
  %93 = vmatpush.bf16.msra.mxu0 0
  %94 = vmatpush.bf16.msra.mxu0 0
  %95 = vmatpush.bf16.msra.mxu0 %v86
  %96 = vmatmul.bf16.gmra.mxu0 %v73
  %v97 = vpop.f32.mrf.mxu0
  %v98 = vadd.f32 %v49, %v97
  %v99 = vpop.f32.mrf.mxu0
  %v100 = vadd.f32 %v49, %v99
  %101 = vmatmul.bf16.gmra.mxu0 %v76
  %v102 = vpop.f32.mrf.mxu0
  %v103 = vadd.f32 %v49, %v102
  %v104 = vpop.f32.mrf.mxu0
  %v105 = vadd.f32 %v49, %v104
  %106 = vmatmul.bf16.gmra.mxu0 %v79
  %v107 = vpop.f32.mrf.mxu0
  %v108 = vadd.f32 %v49, %v107
  %v109 = vpop.f32.mrf.mxu0
  %v110 = vadd.f32 %v49, %v109
  %111 = vmatmul.bf16.gmra.mxu0 %v82
  %v112 = vpop.f32.mrf.mxu0
  %v113 = vadd.f32 %v49, %v112
  %v114 = vpop.f32.mrf.mxu0
  %v115 = vadd.f32 %v49, %v114
  %116 = vdwg.mxu0
  %v117 = vxor.u32 %v98, 2147483648
  %v118 = vmul.f32 %v117, 1.442695
  %v119 = vpow.pop %v118
  %v120 = vadd.f32 %v119, 1.0
  %v121 = vrcp.pop %v120
  %v122 = vmul.f32 %v120, %v121
  %v123 = vsub.f32 1.0, %v122
  %v124 = vmul.f32 %v121, %v123
  %v125 = vadd.f32 %v121, %v124
  %vm126 = vweird.f32 %v120
  %vm127 = vweird.f32 %v121
  %vm128 = vmor %vm126, %vm127
  %v129 = vsel %vm128, %v121, %v125
  %v130 = vand.u32 2147483647, %v120
  %vm131 = vcmp.eq.f32.partialorder %v130, 8.507059e+37
  %v132 = vand.u32 %v120, 2147483648
  %v133 = vor.u32 1.1754944e-38, %v132
  %v134 = vsel %vm131, %v133, %v129
  %v135 = vmul.f32 1.0, %v134
  %v136 = vtanh.pop %v98
  %v137 = vmul.f32 %v135, 0.0
  %139 = vrot.lane.b32.xlu0 %v136, 32
  %v140 = vpop.permute.xlu0 %139
  %v142 = vmul.f32 %v135, %v140
  %144 = vrot.lane.b32.xlu0 %v142, 32
  %v145 = vpop.permute.xlu0 %144
  %v147 = vadd.f32 %v137, %v145
  %v148 = vtanh.pop %v147
  %150 = vrot.lane.b32.xlu0 %v148, 32
  %v151 = vpop.permute.xlu0 %150
  %v153 = vmul.f32 %v135, %v151
  %155 = vrot.lane.b32.xlu0 %v153, 64
  %v156 = vpop.permute.xlu0 %155
  %vm158 = vcmask 261120
  %v159 = vsel %vm158, %v156, 0.0
  %v160 = vpack.c.bf16 %v159, %v159
  %v169 = vunpack.c.l.b16 %v29
  %v170 = vunpack.c.h.b16 %v29
  %v171 = vunpack.c.l.b16 %v30
  %v172 = vunpack.c.h.b16 %v30
  %v173 = vunpack.c.l.b16 %v31
  %v174 = vunpack.c.h.b16 %v31
  %v175 = vunpack.c.l.b16 %v32
  %v176 = vunpack.c.h.b16 %v32
  %v177 = vunpack.c.l.b16 %v33
  %v178 = vunpack.c.h.b16 %v33
  %v179 = vunpack.c.l.b16 %v34
  %v180 = vunpack.c.h.b16 %v34
  %v181 = vunpack.c.l.b16 %v35
  %v182 = vunpack.c.h.b16 %v35
  %v183 = vunpack.c.l.b16 %v36
  %v184 = vunpack.c.h.b16 %v36
  %v185 = vpack.c.b16 %v171, %v169
  %v186 = vpack.c.b16 %v172, %v170
  %v187 = vpack.c.b16 %v175, %v173
  %v188 = vpack.c.b16 %v176, %v174
  %v189 = vpack.c.b16 %v179, %v177
  %v190 = vpack.c.b16 %v180, %v178
  %v191 = vpack.c.b16 %v183, %v181
  %v192 = vpack.c.b16 %v184, %v182
  %vm201 = vcmask 523264
  %v203 = vsel %vm201, %v160, 0
  %205 = vmatpush.bf16.msra.mxu0 0
  %206 = vmatpush.bf16.msra.mxu0 0
  %207 = vmatpush.bf16.msra.mxu0 0
  %208 = vmatpush.bf16.msra.mxu0 0
  %209 = vmatpush.bf16.msra.mxu0 %v191
  %210 = vmatpush.bf16.msra.mxu0 %v189
  %211 = vmatpush.bf16.msra.mxu0 %v187
  %212 = vmatpush.bf16.msra.mxu0 %v185
  %213 = vmatmul.bf16.gmra.mxu0 %v203
  %v214 = vpop.f32.mrf.mxu0
  %v215 = vadd.f32 0.0, %v214
  %v216 = vpop.f32.mrf.mxu0
  %217 = vdwg.mxu0
  %218 = vmatpush.bf16.msra.mxu0 0
  %219 = vmatpush.bf16.msra.mxu0 0
  %220 = vmatpush.bf16.msra.mxu0 0
  %221 = vmatpush.bf16.msra.mxu0 0
  %222 = vmatpush.bf16.msra.mxu0 %v192
  %223 = vmatpush.bf16.msra.mxu0 %v190
  %224 = vmatpush.bf16.msra.mxu0 %v188
  %225 = vmatpush.bf16.msra.mxu0 %v186
  %226 = vmatmul.bf16.gmra.mxu0 %v203
  %v227 = vpop.f32.mrf.mxu0
  %v228 = vadd.f32 0.0, %v227
  %v229 = vpop.f32.mrf.mxu0
  %230 = vdwg.mxu0
  %v231 = vadd.f32 %v100, %v215
  %v232 = vxor.u32 %v231, 2147483648
  %v233 = vmul.f32 %v232, 1.442695
  %v234 = vpow.pop %v233
  %v235 = vadd.f32 %v234, 1.0
  %v236 = vrcp.pop %v235
  %v237 = vmul.f32 %v235, %v236
  %v238 = vsub.f32 1.0, %v237
  %v239 = vmul.f32 %v236, %v238
  %v240 = vadd.f32 %v236, %v239
  %vm241 = vweird.f32 %v235
  %vm242 = vweird.f32 %v236
  %vm243 = vmor %vm241, %vm242
  %v244 = vsel %vm243, %v236, %v240
  %v245 = vand.u32 2147483647, %v235
  %vm246 = vcmp.eq.f32.partialorder %v245, 8.507059e+37
  %v247 = vand.u32 %v235, 2147483648
  %v248 = vor.u32 1.1754944e-38, %v247
  %v249 = vsel %vm246, %v248, %v244
  %v250 = vmul.f32 1.0, %v249
  %v251 = vtanh.pop %v231
  %v252 = vmul.f32 %v250, %v147
  %254 = vrot.lane.b32.xlu0 %v251, 32
  %v255 = vpop.permute.xlu0 %254
  %v257 = vmul.f32 %v250, %v255
  %259 = vrot.lane.b32.xlu0 %v257, 32
  %v260 = vpop.permute.xlu0 %259
  %v262 = vadd.f32 %v252, %v260
  %v263 = vtanh.pop %v262
  %265 = vrot.lane.b32.xlu0 %v263, 32
  %v266 = vpop.permute.xlu0 %265
  %v268 = vmul.f32 %v250, %v266
  %v270 = vperm.slane %v37, 0
  %v272 = vadd.f32 %v270, %v228
  %v273 = vxor.u32 %v272, 2147483648
  %v274 = vmul.f32 %v273, 1.442695
  %v275 = vpow.pop %v274
  %v276 = vadd.f32 %v275, 1.0
  %v277 = vrcp.pop %v276
  %v278 = vmul.f32 %v276, %v277
  %v279 = vsub.f32 1.0, %v278
  %v280 = vmul.f32 %v277, %v279
  %v281 = vadd.f32 %v277, %v280
  %vm282 = vweird.f32 %v276
  %vm283 = vweird.f32 %v277
  %vm284 = vmor %vm282, %vm283
  %v285 = vsel %vm284, %v277, %v281
  %v286 = vand.u32 2147483647, %v276
  %vm287 = vcmp.eq.f32.partialorder %v286, 8.507059e+37
  %v288 = vand.u32 %v276, 2147483648
  %v289 = vor.u32 1.1754944e-38, %v288
  %v290 = vsel %vm287, %v289, %v285
  %v291 = vmul.f32 1.0, %v290
  %v292 = vtanh.pop %v272
  %v293 = vmul.f32 %v291, 0.0
  %295 = vrot.lane.b32.xlu0 %v292, 32
  %v296 = vpop.permute.xlu0 %295
  %v298 = vmul.f32 %v291, %v296
  %300 = vrot.lane.b32.xlu0 %v298, 32
  %v301 = vpop.permute.xlu0 %300
  %v303 = vadd.f32 %v293, %v301
  %v304 = vtanh.pop %v303
  %306 = vrot.lane.b32.xlu0 %v304, 32
  %v307 = vpop.permute.xlu0 %306
  %v309 = vmul.f32 %v291, %v307
  %311 = vrot.lane.b32.xlu0 %v268, 64
  %v312 = vpop.permute.xlu0 %311
  %315 = vrot.lane.b32.xlu0 %v309, 96
  %v316 = vpop.permute.xlu0 %315
  %v318 = vsel %vm158, %v312, %v316
  %v319 = vpack.c.bf16 %v318, %v318
  %v321 = vsel %vm201, %v319, 0
  %323 = vmatpush.bf16.msra.mxu0 0
  %324 = vmatpush.bf16.msra.mxu0 0
  %325 = vmatpush.bf16.msra.mxu0 0
  %326 = vmatpush.bf16.msra.mxu0 0
  %327 = vmatpush.bf16.msra.mxu0 %v191
  %328 = vmatpush.bf16.msra.mxu0 %v189
  %329 = vmatpush.bf16.msra.mxu0 %v187
  %330 = vmatpush.bf16.msra.mxu0 %v185
  %331 = vmatmul.bf16.gmra.mxu0 %v321
  %v332 = vpop.f32.mrf.mxu0
  %v333 = vadd.f32 0.0, %v332
  %v334 = vpop.f32.mrf.mxu0
  %335 = vdwg.mxu0
  %336 = vmatpush.bf16.msra.mxu0 0
  %337 = vmatpush.bf16.msra.mxu0 0
  %338 = vmatpush.bf16.msra.mxu0 0
  %339 = vmatpush.bf16.msra.mxu0 0
  %340 = vmatpush.bf16.msra.mxu0 %v192
  %341 = vmatpush.bf16.msra.mxu0 %v190
  %342 = vmatpush.bf16.msra.mxu0 %v188
  %343 = vmatpush.bf16.msra.mxu0 %v186
  %344 = vmatmul.bf16.gmra.mxu0 %v321
  %v345 = vpop.f32.mrf.mxu0
  %v346 = vadd.f32 0.0, %v345
  %v347 = vpop.f32.mrf.mxu0
  %348 = vdwg.mxu0
  %v349 = vadd.f32 %v103, %v333
  %v350 = vxor.u32 %v349, 2147483648
  %v351 = vmul.f32 %v350, 1.442695
  %v352 = vpow.pop %v351
  %v353 = vadd.f32 %v352, 1.0
  %v354 = vrcp.pop %v353
  %v355 = vmul.f32 %v353, %v354
  %v356 = vsub.f32 1.0, %v355
  %v357 = vmul.f32 %v354, %v356
  %v358 = vadd.f32 %v354, %v357
  %vm359 = vweird.f32 %v353
  %vm360 = vweird.f32 %v354
  %vm361 = vmor %vm359, %vm360
  %v362 = vsel %vm361, %v354, %v358
  %v363 = vand.u32 2147483647, %v353
  %vm364 = vcmp.eq.f32.partialorder %v363, 8.507059e+37
  %v365 = vand.u32 %v353, 2147483648
  %v366 = vor.u32 1.1754944e-38, %v365
  %v367 = vsel %vm364, %v366, %v362
  %v368 = vmul.f32 1.0, %v367
  %v369 = vtanh.pop %v349
  %v370 = vmul.f32 %v368, %v262
  %372 = vrot.lane.b32.xlu0 %v369, 32
  %v373 = vpop.permute.xlu0 %372
  %v375 = vmul.f32 %v368, %v373
  %377 = vrot.lane.b32.xlu0 %v375, 32
  %v378 = vpop.permute.xlu0 %377
  %v380 = vadd.f32 %v370, %v378
  %v381 = vtanh.pop %v380
  %383 = vrot.lane.b32.xlu0 %v381, 32
  %v384 = vpop.permute.xlu0 %383
  %v386 = vmul.f32 %v368, %v384
  %v387 = vadd.f32 %v270, %v346
  %v388 = vxor.u32 %v387, 2147483648
  %v389 = vmul.f32 %v388, 1.442695
  %v390 = vpow.pop %v389
  %v391 = vadd.f32 %v390, 1.0
  %v392 = vrcp.pop %v391
  %v393 = vmul.f32 %v391, %v392
  %v394 = vsub.f32 1.0, %v393
  %v395 = vmul.f32 %v392, %v394
  %v396 = vadd.f32 %v392, %v395
  %vm397 = vweird.f32 %v391
  %vm398 = vweird.f32 %v392
  %vm399 = vmor %vm397, %vm398
  %v400 = vsel %vm399, %v392, %v396
  %v401 = vand.u32 2147483647, %v391
  %vm402 = vcmp.eq.f32.partialorder %v401, 8.507059e+37
  %v403 = vand.u32 %v391, 2147483648
  %v404 = vor.u32 1.1754944e-38, %v403
  %v405 = vsel %vm402, %v404, %v400
  %v406 = vmul.f32 1.0, %v405
  %v407 = vtanh.pop %v387
  %v408 = vmul.f32 %v406, %v303
  %410 = vrot.lane.b32.xlu0 %v407, 32
  %v411 = vpop.permute.xlu0 %410
  %v413 = vmul.f32 %v406, %v411
  %415 = vrot.lane.b32.xlu0 %v413, 32
  %v416 = vpop.permute.xlu0 %415
  %v418 = vadd.f32 %v408, %v416
  %v419 = vtanh.pop %v418
  %421 = vrot.lane.b32.xlu0 %v419, 32
  %v422 = vpop.permute.xlu0 %421
  %v424 = vmul.f32 %v406, %v422
  %426 = vrot.lane.b32.xlu0 %v386, 64
  %v427 = vpop.permute.xlu0 %426
  %430 = vrot.lane.b32.xlu0 %v424, 96
  %v431 = vpop.permute.xlu0 %430
  %v433 = vsel %vm158, %v427, %v431
  %v434 = vpack.c.bf16 %v433, %v433
  %v436 = vsel %vm201, %v434, 0
  %438 = vmatpush.bf16.msra.mxu0 0
  %439 = vmatpush.bf16.msra.mxu0 0
  %440 = vmatpush.bf16.msra.mxu0 0
  %441 = vmatpush.bf16.msra.mxu0 0
  %442 = vmatpush.bf16.msra.mxu0 %v191
  %443 = vmatpush.bf16.msra.mxu0 %v189
  %444 = vmatpush.bf16.msra.mxu0 %v187
  %445 = vmatpush.bf16.msra.mxu0 %v185
  %446 = vmatmul.bf16.gmra.mxu0 %v436
  %v447 = vpop.f32.mrf.mxu0
  %v448 = vadd.f32 0.0, %v447
  %v449 = vpop.f32.mrf.mxu0
  %450 = vdwg.mxu0
  %451 = vmatpush.bf16.msra.mxu0 0
  %452 = vmatpush.bf16.msra.mxu0 0
  %453 = vmatpush.bf16.msra.mxu0 0
  %454 = vmatpush.bf16.msra.mxu0 0
  %455 = vmatpush.bf16.msra.mxu0 %v192
  %456 = vmatpush.bf16.msra.mxu0 %v190
  %457 = vmatpush.bf16.msra.mxu0 %v188
  %458 = vmatpush.bf16.msra.mxu0 %v186
  %459 = vmatmul.bf16.gmra.mxu0 %v436
  %v460 = vpop.f32.mrf.mxu0
  %v461 = vadd.f32 0.0, %v460
  %v462 = vpop.f32.mrf.mxu0
  %463 = vdwg.mxu0
  %v464 = vadd.f32 %v105, %v448
  %v465 = vxor.u32 %v464, 2147483648
  %v466 = vmul.f32 %v465, 1.442695
  %v467 = vpow.pop %v466
  %v468 = vadd.f32 %v467, 1.0
  %v469 = vrcp.pop %v468
  %v470 = vmul.f32 %v468, %v469
  %v471 = vsub.f32 1.0, %v470
  %v472 = vmul.f32 %v469, %v471
  %v473 = vadd.f32 %v469, %v472
  %vm474 = vweird.f32 %v468
  %vm475 = vweird.f32 %v469
  %vm476 = vmor %vm474, %vm475
  %v477 = vsel %vm476, %v469, %v473
  %v478 = vand.u32 2147483647, %v468
  %vm479 = vcmp.eq.f32.partialorder %v478, 8.507059e+37
  %v480 = vand.u32 %v468, 2147483648
  %v481 = vor.u32 1.1754944e-38, %v480
  %v482 = vsel %vm479, %v481, %v477
  %v483 = vmul.f32 1.0, %v482
  %v484 = vtanh.pop %v464
  %v485 = vmul.f32 %v483, %v380
  %487 = vrot.lane.b32.xlu0 %v484, 32
  %v488 = vpop.permute.xlu0 %487
  %v490 = vmul.f32 %v483, %v488
  %492 = vrot.lane.b32.xlu0 %v490, 32
  %v493 = vpop.permute.xlu0 %492
  %v495 = vadd.f32 %v485, %v493
  %v496 = vtanh.pop %v495
  %498 = vrot.lane.b32.xlu0 %v496, 32
  %v499 = vpop.permute.xlu0 %498
  %v501 = vmul.f32 %v483, %v499
  %v502 = vadd.f32 %v270, %v461
  %v503 = vxor.u32 %v502, 2147483648
  %v504 = vmul.f32 %v503, 1.442695
  %v505 = vpow.pop %v504
  %v506 = vadd.f32 %v505, 1.0
  %v507 = vrcp.pop %v506
  %v508 = vmul.f32 %v506, %v507
  %v509 = vsub.f32 1.0, %v508
  %v510 = vmul.f32 %v507, %v509
  %v511 = vadd.f32 %v507, %v510
  %vm512 = vweird.f32 %v506
  %vm513 = vweird.f32 %v507
  %vm514 = vmor %vm512, %vm513
  %v515 = vsel %vm514, %v507, %v511
  %v516 = vand.u32 2147483647, %v506
  %vm517 = vcmp.eq.f32.partialorder %v516, 8.507059e+37
  %v518 = vand.u32 %v506, 2147483648
  %v519 = vor.u32 1.1754944e-38, %v518
  %v520 = vsel %vm517, %v519, %v515
  %v521 = vmul.f32 1.0, %v520
  %v522 = vtanh.pop %v502
  %v523 = vmul.f32 %v521, %v418
  %525 = vrot.lane.b32.xlu0 %v522, 32
  %v526 = vpop.permute.xlu0 %525
  %v528 = vmul.f32 %v521, %v526
  %530 = vrot.lane.b32.xlu0 %v528, 32
  %v531 = vpop.permute.xlu0 %530
  %v533 = vadd.f32 %v523, %v531
  %v534 = vtanh.pop %v533
  %536 = vrot.lane.b32.xlu0 %v534, 32
  %v537 = vpop.permute.xlu0 %536
  %v539 = vmul.f32 %v521, %v537
  %541 = vrot.lane.b32.xlu0 %v501, 64
  %v542 = vpop.permute.xlu0 %541
  %545 = vrot.lane.b32.xlu0 %v539, 96
  %v546 = vpop.permute.xlu0 %545
  %v548 = vsel %vm158, %v542, %v546
  %v549 = vpack.c.bf16 %v548, %v548
  %v551 = vsel %vm201, %v549, 0
  %553 = vmatpush.bf16.msra.mxu0 0
  %554 = vmatpush.bf16.msra.mxu0 0
  %555 = vmatpush.bf16.msra.mxu0 0
  %556 = vmatpush.bf16.msra.mxu0 0
  %557 = vmatpush.bf16.msra.mxu0 %v191
  %558 = vmatpush.bf16.msra.mxu0 %v189
  %559 = vmatpush.bf16.msra.mxu0 %v187
  %560 = vmatpush.bf16.msra.mxu0 %v185
  %561 = vmatmul.bf16.gmra.mxu0 %v551
  %v562 = vpop.f32.mrf.mxu0
  %v563 = vadd.f32 0.0, %v562
  %v564 = vpop.f32.mrf.mxu0
  %565 = vdwg.mxu0
  %566 = vmatpush.bf16.msra.mxu0 0
  %567 = vmatpush.bf16.msra.mxu0 0
  %568 = vmatpush.bf16.msra.mxu0 0
  %569 = vmatpush.bf16.msra.mxu0 0
  %570 = vmatpush.bf16.msra.mxu0 %v192
  %571 = vmatpush.bf16.msra.mxu0 %v190
  %572 = vmatpush.bf16.msra.mxu0 %v188
  %573 = vmatpush.bf16.msra.mxu0 %v186
  %574 = vmatmul.bf16.gmra.mxu0 %v551
  %v575 = vpop.f32.mrf.mxu0
  %v576 = vadd.f32 0.0, %v575
  %v577 = vpop.f32.mrf.mxu0
  %578 = vdwg.mxu0
  %v579 = vadd.f32 %v108, %v563
  %v580 = vxor.u32 %v579, 2147483648
  %v581 = vmul.f32 %v580, 1.442695
  %v582 = vpow.pop %v581
  %v583 = vadd.f32 %v582, 1.0
  %v584 = vrcp.pop %v583
  %v585 = vmul.f32 %v583, %v584
  %v586 = vsub.f32 1.0, %v585
  %v587 = vmul.f32 %v584, %v586
  %v588 = vadd.f32 %v584, %v587
  %vm589 = vweird.f32 %v583
  %vm590 = vweird.f32 %v584
  %vm591 = vmor %vm589, %vm590
  %v592 = vsel %vm591, %v584, %v588
  %v593 = vand.u32 2147483647, %v583
  %vm594 = vcmp.eq.f32.partialorder %v593, 8.507059e+37
  %v595 = vand.u32 %v583, 2147483648
  %v596 = vor.u32 1.1754944e-38, %v595
  %v597 = vsel %vm594, %v596, %v592
  %v598 = vmul.f32 1.0, %v597
  %v599 = vtanh.pop %v579
  %v600 = vmul.f32 %v598, %v495
  %602 = vrot.lane.b32.xlu0 %v599, 32
  %v603 = vpop.permute.xlu0 %602
  %v605 = vmul.f32 %v598, %v603
  %607 = vrot.lane.b32.xlu0 %v605, 32
  %v608 = vpop.permute.xlu0 %607
  %v610 = vadd.f32 %v600, %v608
  %v611 = vtanh.pop %v610
  %613 = vrot.lane.b32.xlu0 %v611, 32
  %v614 = vpop.permute.xlu0 %613
  %v616 = vmul.f32 %v598, %v614
  %v617 = vadd.f32 %v270, %v576
  %v618 = vxor.u32 %v617, 2147483648
  %v619 = vmul.f32 %v618, 1.442695
  %v620 = vpow.pop %v619
  %v621 = vadd.f32 %v620, 1.0
  %v622 = vrcp.pop %v621
  %v623 = vmul.f32 %v621, %v622
  %v624 = vsub.f32 1.0, %v623
  %v625 = vmul.f32 %v622, %v624
  %v626 = vadd.f32 %v622, %v625
  %vm627 = vweird.f32 %v621
  %vm628 = vweird.f32 %v622
  %vm629 = vmor %vm627, %vm628
  %v630 = vsel %vm629, %v622, %v626
  %v631 = vand.u32 2147483647, %v621
  %vm632 = vcmp.eq.f32.partialorder %v631, 8.507059e+37
  %v633 = vand.u32 %v621, 2147483648
  %v634 = vor.u32 1.1754944e-38, %v633
  %v635 = vsel %vm632, %v634, %v630
  %v636 = vmul.f32 1.0, %v635
  %v637 = vtanh.pop %v617
  %v638 = vmul.f32 %v636, %v533
  %640 = vrot.lane.b32.xlu0 %v637, 32
  %v641 = vpop.permute.xlu0 %640
  %v643 = vmul.f32 %v636, %v641
  %645 = vrot.lane.b32.xlu0 %v643, 32
  %v646 = vpop.permute.xlu0 %645
  %v648 = vadd.f32 %v638, %v646
  %v649 = vtanh.pop %v648
  %651 = vrot.lane.b32.xlu0 %v649, 32
  %v652 = vpop.permute.xlu0 %651
  %v654 = vmul.f32 %v636, %v652
  %656 = vrot.lane.b32.xlu0 %v616, 64
  %v657 = vpop.permute.xlu0 %656
  %660 = vrot.lane.b32.xlu0 %v654, 96
  %v661 = vpop.permute.xlu0 %660
  %v663 = vsel %vm158, %v657, %v661
  %v664 = vpack.c.bf16 %v663, %v663
  %v666 = vsel %vm201, %v664, 0
  %668 = vmatpush.bf16.msra.mxu0 0
  %669 = vmatpush.bf16.msra.mxu0 0
  %670 = vmatpush.bf16.msra.mxu0 0
  %671 = vmatpush.bf16.msra.mxu0 0
  %672 = vmatpush.bf16.msra.mxu0 %v191
  %673 = vmatpush.bf16.msra.mxu0 %v189
  %674 = vmatpush.bf16.msra.mxu0 %v187
  %675 = vmatpush.bf16.msra.mxu0 %v185
  %676 = vmatmul.bf16.gmra.mxu0 %v666
  %v677 = vpop.f32.mrf.mxu0
  %v678 = vadd.f32 0.0, %v677
  %v679 = vpop.f32.mrf.mxu0
  %680 = vdwg.mxu0
  %681 = vmatpush.bf16.msra.mxu0 0
  %682 = vmatpush.bf16.msra.mxu0 0
  %683 = vmatpush.bf16.msra.mxu0 0
  %684 = vmatpush.bf16.msra.mxu0 0
  %685 = vmatpush.bf16.msra.mxu0 %v192
  %686 = vmatpush.bf16.msra.mxu0 %v190
  %687 = vmatpush.bf16.msra.mxu0 %v188
  %688 = vmatpush.bf16.msra.mxu0 %v186
  %689 = vmatmul.bf16.gmra.mxu0 %v666
  %v690 = vpop.f32.mrf.mxu0
  %v691 = vadd.f32 0.0, %v690
  %v692 = vpop.f32.mrf.mxu0
  %693 = vdwg.mxu0
  %v694 = vadd.f32 %v110, %v678
  %v695 = vxor.u32 %v694, 2147483648
  %v696 = vmul.f32 %v695, 1.442695
  %v697 = vpow.pop %v696
  %v698 = vadd.f32 %v697, 1.0
  %v699 = vrcp.pop %v698
  %v700 = vmul.f32 %v698, %v699
  %v701 = vsub.f32 1.0, %v700
  %v702 = vmul.f32 %v699, %v701
  %v703 = vadd.f32 %v699, %v702
  %vm704 = vweird.f32 %v698
  %vm705 = vweird.f32 %v699
  %vm706 = vmor %vm704, %vm705
  %v707 = vsel %vm706, %v699, %v703
  %v708 = vand.u32 2147483647, %v698
  %vm709 = vcmp.eq.f32.partialorder %v708, 8.507059e+37
  %v710 = vand.u32 %v698, 2147483648
  %v711 = vor.u32 1.1754944e-38, %v710
  %v712 = vsel %vm709, %v711, %v707
  %v713 = vmul.f32 1.0, %v712
  %v714 = vtanh.pop %v694
  %v715 = vmul.f32 %v713, %v610
  %717 = vrot.lane.b32.xlu0 %v714, 32
  %v718 = vpop.permute.xlu0 %717
  %v720 = vmul.f32 %v713, %v718
  %722 = vrot.lane.b32.xlu0 %v720, 32
  %v723 = vpop.permute.xlu0 %722
  %v725 = vadd.f32 %v715, %v723
  %v726 = vtanh.pop %v725
  %728 = vrot.lane.b32.xlu0 %v726, 32
  %v729 = vpop.permute.xlu0 %728
  %v731 = vmul.f32 %v713, %v729
  %v732 = vadd.f32 %v270, %v691
  %v733 = vxor.u32 %v732, 2147483648
  %v734 = vmul.f32 %v733, 1.442695
  %v735 = vpow.pop %v734
  %v736 = vadd.f32 %v735, 1.0
  %v737 = vrcp.pop %v736
  %v738 = vmul.f32 %v736, %v737
  %v739 = vsub.f32 1.0, %v738
  %v740 = vmul.f32 %v737, %v739
  %v741 = vadd.f32 %v737, %v740
  %vm742 = vweird.f32 %v736
  %vm743 = vweird.f32 %v737
  %vm744 = vmor %vm742, %vm743
  %v745 = vsel %vm744, %v737, %v741
  %v746 = vand.u32 2147483647, %v736
  %vm747 = vcmp.eq.f32.partialorder %v746, 8.507059e+37
  %v748 = vand.u32 %v736, 2147483648
  %v749 = vor.u32 1.1754944e-38, %v748
  %v750 = vsel %vm747, %v749, %v745
  %v751 = vmul.f32 1.0, %v750
  %v752 = vtanh.pop %v732
  %v753 = vmul.f32 %v751, %v648
  %755 = vrot.lane.b32.xlu0 %v752, 32
  %v756 = vpop.permute.xlu0 %755
  %v758 = vmul.f32 %v751, %v756
  %760 = vrot.lane.b32.xlu0 %v758, 32
  %v761 = vpop.permute.xlu0 %760
  %v763 = vadd.f32 %v753, %v761
  %v764 = vtanh.pop %v763
  %766 = vrot.lane.b32.xlu0 %v764, 32
  %v767 = vpop.permute.xlu0 %766
  %v769 = vmul.f32 %v751, %v767
  %771 = vrot.lane.b32.xlu0 %v731, 64
  %v772 = vpop.permute.xlu0 %771
  %775 = vrot.lane.b32.xlu0 %v769, 96
  %v776 = vpop.permute.xlu0 %775
  %v778 = vsel %vm158, %v772, %v776
  %v779 = vpack.c.bf16 %v778, %v778
  %v781 = vsel %vm201, %v779, 0
  %783 = vmatpush.bf16.msra.mxu0 0
  %784 = vmatpush.bf16.msra.mxu0 0
  %785 = vmatpush.bf16.msra.mxu0 0
  %786 = vmatpush.bf16.msra.mxu0 0
  %787 = vmatpush.bf16.msra.mxu0 %v191
  %788 = vmatpush.bf16.msra.mxu0 %v189
  %789 = vmatpush.bf16.msra.mxu0 %v187
  %790 = vmatpush.bf16.msra.mxu0 %v185
  %791 = vmatmul.bf16.gmra.mxu0 %v781
  %v792 = vpop.f32.mrf.mxu0
  %v793 = vadd.f32 0.0, %v792
  %v794 = vpop.f32.mrf.mxu0
  %795 = vdwg.mxu0
  %796 = vmatpush.bf16.msra.mxu0 0
  %797 = vmatpush.bf16.msra.mxu0 0
  %798 = vmatpush.bf16.msra.mxu0 0
  %799 = vmatpush.bf16.msra.mxu0 0
  %800 = vmatpush.bf16.msra.mxu0 %v192
  %801 = vmatpush.bf16.msra.mxu0 %v190
  %802 = vmatpush.bf16.msra.mxu0 %v188
  %803 = vmatpush.bf16.msra.mxu0 %v186
  %804 = vmatmul.bf16.gmra.mxu0 %v781
  %v805 = vpop.f32.mrf.mxu0
  %v806 = vadd.f32 0.0, %v805
  %v807 = vpop.f32.mrf.mxu0
  %808 = vdwg.mxu0
  %v809 = vadd.f32 %v113, %v793
  %v810 = vxor.u32 %v809, 2147483648
  %v811 = vmul.f32 %v810, 1.442695
  %v812 = vpow.pop %v811
  %v813 = vadd.f32 %v812, 1.0
  %v814 = vrcp.pop %v813
  %v815 = vmul.f32 %v813, %v814
  %v816 = vsub.f32 1.0, %v815
  %v817 = vmul.f32 %v814, %v816
  %v818 = vadd.f32 %v814, %v817
  %vm819 = vweird.f32 %v813
  %vm820 = vweird.f32 %v814
  %vm821 = vmor %vm819, %vm820
  %v822 = vsel %vm821, %v814, %v818
  %v823 = vand.u32 2147483647, %v813
  %vm824 = vcmp.eq.f32.partialorder %v823, 8.507059e+37
  %v825 = vand.u32 %v813, 2147483648
  %v826 = vor.u32 1.1754944e-38, %v825
  %v827 = vsel %vm824, %v826, %v822
  %v828 = vmul.f32 1.0, %v827
  %v829 = vtanh.pop %v809
  %v830 = vmul.f32 %v828, %v725
  %832 = vrot.lane.b32.xlu0 %v829, 32
  %v833 = vpop.permute.xlu0 %832
  %v835 = vmul.f32 %v828, %v833
  %837 = vrot.lane.b32.xlu0 %v835, 32
  %v838 = vpop.permute.xlu0 %837
  %v840 = vadd.f32 %v830, %v838
  %v841 = vtanh.pop %v840
  %843 = vrot.lane.b32.xlu0 %v841, 32
  %v844 = vpop.permute.xlu0 %843
  %v846 = vmul.f32 %v828, %v844
  %v847 = vadd.f32 %v270, %v806
  %v848 = vxor.u32 %v847, 2147483648
  %v849 = vmul.f32 %v848, 1.442695
  %v850 = vpow.pop %v849
  %v851 = vadd.f32 %v850, 1.0
  %v852 = vrcp.pop %v851
  %v853 = vmul.f32 %v851, %v852
  %v854 = vsub.f32 1.0, %v853
  %v855 = vmul.f32 %v852, %v854
  %v856 = vadd.f32 %v852, %v855
  %vm857 = vweird.f32 %v851
  %vm858 = vweird.f32 %v852
  %vm859 = vmor %vm857, %vm858
  %v860 = vsel %vm859, %v852, %v856
  %v861 = vand.u32 2147483647, %v851
  %vm862 = vcmp.eq.f32.partialorder %v861, 8.507059e+37
  %v863 = vand.u32 %v851, 2147483648
  %v864 = vor.u32 1.1754944e-38, %v863
  %v865 = vsel %vm862, %v864, %v860
  %v866 = vmul.f32 1.0, %v865
  %v867 = vtanh.pop %v847
  %v868 = vmul.f32 %v866, %v763
  %870 = vrot.lane.b32.xlu0 %v867, 32
  %v871 = vpop.permute.xlu0 %870
  %v873 = vmul.f32 %v866, %v871
  %875 = vrot.lane.b32.xlu0 %v873, 32
  %v876 = vpop.permute.xlu0 %875
  %v878 = vadd.f32 %v868, %v876
  %v879 = vtanh.pop %v878
  %881 = vrot.lane.b32.xlu0 %v879, 32
  %v882 = vpop.permute.xlu0 %881
  %v884 = vmul.f32 %v866, %v882
  %886 = vrot.lane.b32.xlu0 %v846, 64
  %v887 = vpop.permute.xlu0 %886
  %890 = vrot.lane.b32.xlu0 %v884, 96
  %v891 = vpop.permute.xlu0 %890
  %v893 = vsel %vm158, %v887, %v891
  %v894 = vpack.c.bf16 %v893, %v893
  %v896 = vsel %vm201, %v894, 0
  %898 = vmatpush.bf16.msra.mxu0 0
  %899 = vmatpush.bf16.msra.mxu0 0
  %900 = vmatpush.bf16.msra.mxu0 0
  %901 = vmatpush.bf16.msra.mxu0 0
  %902 = vmatpush.bf16.msra.mxu0 %v191
  %903 = vmatpush.bf16.msra.mxu0 %v189
  %904 = vmatpush.bf16.msra.mxu0 %v187
  %905 = vmatpush.bf16.msra.mxu0 %v185
  %906 = vmatmul.bf16.gmra.mxu0 %v896
  %v907 = vpop.f32.mrf.mxu0
  %v908 = vadd.f32 0.0, %v907
  %v909 = vpop.f32.mrf.mxu0
  %910 = vdwg.mxu0
  %911 = vmatpush.bf16.msra.mxu0 0
  %912 = vmatpush.bf16.msra.mxu0 0
  %913 = vmatpush.bf16.msra.mxu0 0
  %914 = vmatpush.bf16.msra.mxu0 0
  %915 = vmatpush.bf16.msra.mxu0 %v192
  %916 = vmatpush.bf16.msra.mxu0 %v190
  %917 = vmatpush.bf16.msra.mxu0 %v188
  %918 = vmatpush.bf16.msra.mxu0 %v186
  %919 = vmatmul.bf16.gmra.mxu0 %v896
  %v920 = vpop.f32.mrf.mxu0
  %v921 = vadd.f32 0.0, %v920
  %v922 = vpop.f32.mrf.mxu0
  %923 = vdwg.mxu0
  %v924 = vadd.f32 %v115, %v908
  %v925 = vxor.u32 %v924, 2147483648
  %v926 = vmul.f32 %v925, 1.442695
  %v927 = vpow.pop %v926
  %v928 = vadd.f32 %v927, 1.0
  %v929 = vrcp.pop %v928
  %v930 = vmul.f32 %v928, %v929
  %v931 = vsub.f32 1.0, %v930
  %v932 = vmul.f32 %v929, %v931
  %v933 = vadd.f32 %v929, %v932
  %vm934 = vweird.f32 %v928
  %vm935 = vweird.f32 %v929
  %vm936 = vmor %vm934, %vm935
  %v937 = vsel %vm936, %v929, %v933
  %v938 = vand.u32 2147483647, %v928
  %vm939 = vcmp.eq.f32.partialorder %v938, 8.507059e+37
  %v940 = vand.u32 %v928, 2147483648
  %v941 = vor.u32 1.1754944e-38, %v940
  %v942 = vsel %vm939, %v941, %v937
  %v943 = vmul.f32 1.0, %v942
  %v944 = vtanh.pop %v924
  %v945 = vmul.f32 %v943, %v840
  %947 = vrot.lane.b32.xlu0 %v944, 32
  %v948 = vpop.permute.xlu0 %947
  %v950 = vmul.f32 %v943, %v948
  %952 = vrot.lane.b32.xlu0 %v950, 32
  %v953 = vpop.permute.xlu0 %952
  %v955 = vadd.f32 %v945, %v953
  %v956 = vtanh.pop %v955
  %958 = vrot.lane.b32.xlu0 %v956, 32
  %v959 = vpop.permute.xlu0 %958
  %v961 = vmul.f32 %v943, %v959
  %v962 = vadd.f32 %v270, %v921
  %v963 = vxor.u32 %v962, 2147483648
  %v964 = vmul.f32 %v963, 1.442695
  %v965 = vpow.pop %v964
  %v966 = vadd.f32 %v965, 1.0
  %v967 = vrcp.pop %v966
  %v968 = vmul.f32 %v966, %v967
  %v969 = vsub.f32 1.0, %v968
  %v970 = vmul.f32 %v967, %v969
  %v971 = vadd.f32 %v967, %v970
  %vm972 = vweird.f32 %v966
  %vm973 = vweird.f32 %v967
  %vm974 = vmor %vm972, %vm973
  %v975 = vsel %vm974, %v967, %v971
  %v976 = vand.u32 2147483647, %v966
  %vm977 = vcmp.eq.f32.partialorder %v976, 8.507059e+37
  %v978 = vand.u32 %v966, 2147483648
  %v979 = vor.u32 1.1754944e-38, %v978
  %v980 = vsel %vm977, %v979, %v975
  %v981 = vmul.f32 1.0, %v980
  %v982 = vtanh.pop %v962
  %v983 = vmul.f32 %v981, %v878
  %985 = vrot.lane.b32.xlu0 %v982, 32
  %v986 = vpop.permute.xlu0 %985
  %v988 = vmul.f32 %v981, %v986
  %990 = vrot.lane.b32.xlu0 %v988, 32
  %v991 = vpop.permute.xlu0 %990
  %v993 = vadd.f32 %v983, %v991
  %v994 = vtanh.pop %v993
  %996 = vrot.lane.b32.xlu0 %v994, 32
  %v997 = vpop.permute.xlu0 %996
  %v999 = vmul.f32 %v981, %v997
  %1001 = vrot.lane.b32.xlu0 %v961, 64
  %v1002 = vpop.permute.xlu0 %1001
  %1005 = vrot.lane.b32.xlu0 %v999, 96
  %v1006 = vpop.permute.xlu0 %1005
  %v1008 = vsel %vm158, %v1002, %v1006
  %v1009 = vpack.c.bf16 %v1008, %v1008
  %v1011 = vsel %vm201, %v1009, 0
  %1013 = vmatpush.bf16.msra.mxu0 0
  %1014 = vmatpush.bf16.msra.mxu0 0
  %1015 = vmatpush.bf16.msra.mxu0 0
  %1016 = vmatpush.bf16.msra.mxu0 0
  %1017 = vmatpush.bf16.msra.mxu0 %v192
  %1018 = vmatpush.bf16.msra.mxu0 %v190
  %1019 = vmatpush.bf16.msra.mxu0 %v188
  %1020 = vmatpush.bf16.msra.mxu0 %v186
  %1021 = vmatmul.bf16.gmra.mxu0 %v1011
  %v1022 = vpop.f32.mrf.mxu0
  %v1023 = vadd.f32 0.0, %v1022
  %v1024 = vpop.f32.mrf.mxu0
  %1025 = vdwg.mxu0
  %v1026 = vadd.f32 %v270, %v1023
  %v1027 = vxor.u32 %v1026, 2147483648
  %v1028 = vmul.f32 %v1027, 1.442695
  %v1029 = vpow.pop %v1028
  %v1030 = vadd.f32 %v1029, 1.0
  %v1031 = vrcp.pop %v1030
  %v1032 = vmul.f32 %v1030, %v1031
  %v1033 = vsub.f32 1.0, %v1032
  %v1034 = vmul.f32 %v1031, %v1033
  %v1035 = vadd.f32 %v1031, %v1034
  %vm1036 = vweird.f32 %v1030
  %vm1037 = vweird.f32 %v1031
  %vm1038 = vmor %vm1036, %vm1037
  %v1039 = vsel %vm1038, %v1031, %v1035
  %v1040 = vand.u32 2147483647, %v1030
  %vm1041 = vcmp.eq.f32.partialorder %v1040, 8.507059e+37
  %v1042 = vand.u32 %v1030, 2147483648
  %v1043 = vor.u32 1.1754944e-38, %v1042
  %v1044 = vsel %vm1041, %v1043, %v1039
  %v1045 = vmul.f32 1.0, %v1044
  %v1046 = vtanh.pop %v1026
  %v1047 = vmul.f32 %v1045, %v993
  %1049 = vrot.lane.b32.xlu0 %v1046, 32
  %v1050 = vpop.permute.xlu0 %1049
  %v1052 = vmul.f32 %v1045, %v1050
  %1054 = vrot.lane.b32.xlu0 %v1052, 32
  %v1055 = vpop.permute.xlu0 %1054
  %v1057 = vadd.f32 %v1047, %v1055
  %v1058 = vtanh.pop %v1057
  %1060 = vrot.lane.b32.xlu0 %v1058, 32
  %v1061 = vpop.permute.xlu0 %1060
  %v1063 = vmul.f32 %v1045, %v1061
  %v1064 = vld [vmem:[%s5] sm:$0xff]
  %v1065 = vld [vmem:[%s5 + $0x8] sm:$0xff]
  %v1066 = vld [vmem:[%s5 + $0x10] sm:$0xff]
  %v1067 = vld [vmem:[%s5 + $0x18] sm:$0xff]
  %v1068 = vld [vmem:[#allocation2] sm:$0x1]
  %v1070 = vperm.slane %v1068, 0
  %1073 = vrot.lane.b32.xlu0 %v1063, 64
  %v1074 = vpop.permute.xlu0 %1073
  %v1075 = vsel %vm158, %v1074, 0
  %1077 = vmatpush.msra.mxu0 0.0
  %1078 = vmatpush.msra.mxu0 0.0
  %1079 = vmatpush.msra.mxu0 0.0
  %1080 = vmatpush.msra.mxu0 0.0
  %1081 = vmatpush.msra.mxu0 0.0
  %1082 = vmatpush.msra.mxu0 0.0
  %1083 = vmatpush.msra.mxu0 0.0
  %1084 = vmatpush.msra.mxu0 0.0
  %1085 = vmatpush.msra.mxu0 0.0
  %1086 = vmatpush.msra.mxu0 0.0
  %1087 = vmatpush.msra.mxu0 0.0
  %1088 = vmatpush.msra.mxu0 0.0
  %1089 = vmatpush.msra.mxu0 %v1067
  %1090 = vmatpush.msra.mxu0 %v1066
  %1091 = vmatpush.msra.mxu0 %v1065
  %1092 = vmatpush.msra.mxu0 %v1064
  %1093 = vmatmul.f32.gmra.mxu0 %v1075
  %v1094 = vpop.f32.mrf.mxu0
  %v1095 = vadd.f32 %v1070, %v1094
  %1096 = vdwg.mxu0
  %vm1097 = vcmask 7168
  %1098 = vst.msk [vmem:[%s7] sm:$0xff] %vm1097, %v1095
  // Predicated region
  $region30: #{tpu_custom_call.1} parent=0 // pred_check
    _
  $region31: #{tpu_custom_call.1} parent=0 // pred_check_branch
    %1100 = sbr.rel (0) target = $region33
  $region32: #{tpu_custom_call.1} parent=0 // pred_region
    _
  $region33: #{tpu_custom_call.1} parent=0 // pred_fallthru
    _
  // Predicated region
  $region34: #{tpu_custom_call.1} parent=0 // pred_check
    _
  $region35: #{tpu_custom_call.1} parent=0 // pred_check_branch
    %1102 = sbr.rel (0) target = $region37
  $region36: #{tpu_custom_call.1} parent=0 // pred_region
    _
  $region37: #{tpu_custom_call.1} parent=0 // pred_fallthru
    _

</llo_original>
